<compile_context>
chip_gen: v5e
topology: v5e:2x2
jax: 0.10.0
libtpu: 0.0.40
codegen_flags: <defaults>
</compile_context>

<pallas_src>
import functools

import jax
import jax.numpy as jnp
from jax import lax
from jax.experimental import pallas as pl
from jax.experimental.pallas import tpu as pltpu

EPS = 1e-5
LANES = 128
VMEM_LIMIT = 32 * 1024 * 1024   # safe on v5e/v6e (128 MiB) and v7x (64 MiB)


def _round_up(v, m):
    return ((v + m - 1) // m) * m


# ----------------------------- Pallas kernels ------------------------------

def _conv_stats_kernel(x_ref, w_ref, y_ref, st_ref, *, nb, ho, wo, cpad, stride):
    """conv1 (stride handled via input phases) + BN1 statistics accumulation.

    x_ref : (nb, stride*stride, hp, wp, cpad) bf16 phase-decomposed input tile
    w_ref : (9, cpad, cpad) bf16 weights, tap-major (kh*3+kw)
    y_ref : (nb, ho, wo, cpad) f32 conv output tile
    st_ref: (2, cpad) f32 accumulator (row0 = sum, row1 = sum of squares),
            grid-resident -> the grid axis must be "arbitrary".
    """
    mt = nb * ho * wo
    acc = jnp.zeros((mt, cpad), jnp.float32)
    t = 0
    for kh in range(3):
        for kw in range(3):
            ph = (kh % stride) * stride + (kw % stride)
            i0, j0 = kh // stride, kw // stride
            xs = x_ref[:, ph:ph + 1, i0:i0 + ho, j0:j0 + wo, :].reshape(mt, cpad)
            acc += jnp.dot(xs, w_ref[t], preferred_element_type=jnp.float32)
            t += 1
    y_ref[...] = acc.reshape(nb, ho, wo, cpad)

    @pl.when(pl.program_id(0) == 0)
    def _():
        st_ref[...] = jnp.zeros_like(st_ref)

    s = jnp.sum(acc, axis=0, keepdims=True)
    ss = jnp.sum(acc * acc, axis=0, keepdims=True)
    st_ref[...] += jnp.concatenate([s, ss], axis=0)


def _bn_relu_conv_stats_kernel(y1_ref, st1_ref, g_ref, b_ref, w_ref,
                               y2_ref, st2_ref, apad_ref,
                               *, nb, ho, wo, cpad, m_total):
    """BN1 finalize + ReLU, fused with conv2 (stride 1) + BN2 statistics.

    The intermediate activation is staged (zero-padded by 1 pixel) into a
    VMEM bf16 scratch and never touches HBM.
    """
    mt = nb * ho * wo
    inv_m = 1.0 / m_total
    mu = st1_ref[0:1, :] * inv_m
    var = st1_ref[1:2, :] * inv_m - mu * mu            # biased (training BN)
    y1 = y1_ref[...].reshape(mt, cpad)
    a = jnp.maximum((y1 - mu) * lax.rsqrt(var + EPS) * g_ref[...] + b_ref[...], 0.0)

    apad_ref[...] = jnp.zeros_like(apad_ref)
    apad_ref[:, 1:ho + 1, 1:wo + 1, :] = a.astype(jnp.bfloat16).reshape(nb, ho, wo, cpad)

    acc = jnp.zeros((mt, cpad), jnp.float32)
    t = 0
    for kh in range(3):
        for kw in range(3):
            xs = apad_ref[:, kh:kh + ho, kw:kw + wo, :].reshape(mt, cpad)
            acc += jnp.dot(xs, w_ref[t], preferred_element_type=jnp.float32)
            t += 1
    y2_ref[...] = acc.reshape(nb, ho, wo, cpad)

    @pl.when(pl.program_id(0) == 0)
    def _():
        st2_ref[...] = jnp.zeros_like(st2_ref)

    s = jnp.sum(acc, axis=0, keepdims=True)
    ss = jnp.sum(acc * acc, axis=0, keepdims=True)
    st2_ref[...] += jnp.concatenate([s, ss], axis=0)


def _bn_add_relu_kernel(y2_ref, st2_ref, g_ref, b_ref, x_ref, o_ref,
                        *, nb, ho, wo, cpad, m_total, stride):
    """BN2 finalize + residual add + final ReLU (fully parallel over tiles)."""
    mt = nb * ho * wo
    inv_m = 1.0 / m_total
    mu = st2_ref[0:1, :] * inv_m
    var = st2_ref[1:2, :] * inv_m - mu * mu
    y2 = y2_ref[...].reshape(mt, cpad)
    bn = (y2 - mu) * lax.rsqrt(var + EPS) * g_ref[...] + b_ref[...]

    # Skip path: spatial subsample comes from the (single) pre-selected input
    # phase; the zero lanes of the channel-padded input realize the channel
    # zero-pad of the PyTorch skip for free (no materialized padded skip).
    i0 = 1 // stride
    skip = x_ref[:, :, i0:i0 + ho, i0:i0 + wo, :].astype(jnp.float32).reshape(mt, cpad)

    o_ref[...] = jnp.maximum(bn + skip, 0.0).reshape(nb, ho, wo, cpad)


# ------------------------------- JAX glue -----------------------------------

def _pack_weight(w_oihw, cpad):
    """(Cout, Cin, 3, 3) -> (9, cpad, cpad) bf16, tap-major (kh, kw)."""
    cout, cin = w_oihw.shape[0], w_oihw.shape[1]
    wf = jnp.transpose(w_oihw, (2, 3, 1, 0)).reshape(9, cin, cout)
    wf = jnp.pad(wf, ((0, 0), (0, cpad - cin), (0, cpad - cout)))
    return wf.astype(jnp.bfloat16)


def _pad_vec(v, cpad):
    c = v.shape[0]
    return jnp.pad(v.reshape(1, c).astype(jnp.float32), ((0, 0), (0, cpad - c)))


def residual_block_forward(x_nchw, params, stride):
    """Pallas implementation of ResidualBlock.forward (training-mode BN)."""
    n, cin, h, w = x_nchw.shape
    cout = params["w1"].shape[0]
    ho = (h + 2 - 3) // stride + 1
    wo = (w + 2 - 3) // stride + 1
    cpad = _round_up(max(cin, cout), LANES)   # lane-dense channels
    nb = 1                                    # images per grid step (tile = nb*ho*wo rows)
    grid = (n // nb,)
    m_total = n * ho * wo

    # NHWC, spatial pad 1, channel zero-pad to cpad, then a cheap space-to-phase
    # permutation (x-sized) so strided conv taps become contiguous slices.
    s = stride
    hp = -(-(h + 2) // s)
    wp = -(-(w + 2) // s)
    x = jnp.transpose(x_nchw, (0, 2, 3, 1)).astype(jnp.float32)
    xpad = jnp.pad(x, ((0, 0), (1, hp * s - h - 1), (1, wp * s - w - 1), (0, cpad - cin)))
    xph = xpad.reshape(n, hp, s, wp, s, cpad)
    xph = jnp.transpose(xph, (0, 2, 4, 1, 3, 5)).reshape(n, s * s, hp, wp, cpad)
    xph = xph.astype(jnp.bfloat16)            # bf16 MXU inputs, halves HBM bytes

    w1f = _pack_weight(params["w1"], cpad)
    w2f = _pack_weight(params["w2"], cpad)
    g1, b1 = _pad_vec(params["g1"], cpad), _pad_vec(params["b1"], cpad)
    g2, b2 = _pad_vec(params["g2"], cpad), _pad_vec(params["b2"], cpad)

    xph_spec = pl.BlockSpec((nb, s * s, hp, wp, cpad), lambda i: (i, 0, 0, 0, 0))
    ph_skip = (1 % s) * s + (1 % s)           # only phase needed by the skip
    xskip_spec = pl.BlockSpec((nb, 1, hp, wp, cpad), lambda i: (i, ph_skip, 0, 0, 0))
    w_spec = pl.BlockSpec((9, cpad, cpad), lambda i: (0, 0, 0))
    y_spec = pl.BlockSpec((nb, ho, wo, cpad), lambda i: (i, 0, 0, 0))
    st_spec = pl.BlockSpec((2, cpad), lambda i: (0, 0))
    v_spec = pl.BlockSpec((1, cpad), lambda i: (0, 0))

    y_shape = jax.ShapeDtypeStruct((n, ho, wo, cpad), jnp.float32)
    st_shape = jax.ShapeDtypeStruct((2, cpad), jnp.float32)

    bytes_x = n * s * s * hp * wp * cpad * 2
    bytes_w = 9 * cpad * cpad * 2
    bytes_y = n * ho * wo * cpad * 4
    bytes_sm = 4 * cpad * 4
    mm_flops = 2 * m_total * 9 * cpad * cpad

    # --- K1: conv1 + BN1 statistics ---------------------------------------
    y1, st1 = pl.pallas_call(
        functools.partial(_conv_stats_kernel, nb=nb, ho=ho, wo=wo, cpad=cpad, stride=s),
        grid=grid,
        in_specs=[xph_spec, w_spec],
        out_specs=(y_spec, st_spec),
        out_shape=(y_shape, st_shape),
        compiler_params=pltpu.CompilerParams(
            dimension_semantics=("arbitrary",),       # stats accumulator is grid-resident
            vmem_limit_bytes=VMEM_LIMIT),
        cost_estimate=pl.CostEstimate(
            flops=mm_flops, transcendentals=0,
            bytes_accessed=bytes_x + bytes_w + bytes_y + bytes_sm),
    )(xph, w1f)

    # --- K2: BN1 finalize + ReLU + conv2 + BN2 statistics (fused) ----------
    y2, st2 = pl.pallas_call(
        functools.partial(_bn_relu_conv_stats_kernel, nb=nb, ho=ho, wo=wo, cpad=cpad,
                          m_total=m_total),
        grid=grid,
        in_specs=[y_spec, st_spec, v_spec, v_spec, w_spec],
        out_specs=(y_spec, st_spec),
        out_shape=(y_shape, st_shape),
        scratch_shapes=[pltpu.VMEM((nb, ho + 2, wo + 2, cpad), jnp.bfloat16)],
        compiler_params=pltpu.CompilerParams(
            dimension_semantics=("arbitrary",),
            vmem_limit_bytes=VMEM_LIMIT),
        cost_estimate=pl.CostEstimate(
            flops=mm_flops + 10 * m_total * cpad, transcendentals=cpad,
            bytes_accessed=2 * bytes_y + bytes_w + 3 * bytes_sm),
    )(y1, st1, g1, b1, w2f)

    # --- K3: BN2 finalize + skip add + ReLU (parallel over tiles) ----------
    out = pl.pallas_call(
        functools.partial(_bn_add_relu_kernel, nb=nb, ho=ho, wo=wo, cpad=cpad,
                          m_total=m_total, stride=s),
        grid=grid,
        in_specs=[y_spec, st_spec, v_spec, v_spec, xskip_spec],
        out_specs=y_spec,
        out_shape=y_shape,
        compiler_params=pltpu.CompilerParams(
            dimension_semantics=("parallel",),        # no cross-tile state -> both v7x TCs
            vmem_limit_bytes=VMEM_LIMIT),
        cost_estimate=pl.CostEstimate(
            flops=10 * m_total * cpad, transcendentals=cpad,
            bytes_accessed=2 * bytes_y + bytes_x // (s * s) + 3 * bytes_sm),
    )(y2, st2, g2, b2, xph)

    out = out[..., :cout]                             # strip channel padding
    return jnp.transpose(out, (0, 3, 1, 2))           # back to NCHW


# --------------------------- pure-JAX reference ------------------------------

def _bn_train(y_nhwc, g, b):
    mu = jnp.mean(y_nhwc, axis=(0, 1, 2), keepdims=True)
    var = jnp.mean(jnp.square(y_nhwc - mu), axis=(0, 1, 2), keepdims=True)
    return (y_nhwc - mu) * lax.rsqrt(var + EPS) * g.reshape(1, 1, 1, -1) + b.reshape(1, 1, 1, -1)


def residual_block_reference(x_nchw, params, stride, matmul_dtype=jnp.float32):
    """Reference.  matmul_dtype=bf16 mirrors the kernel's MXU input rounding."""
    n, cin, h, w = x_nchw.shape
    cout = params["w1"].shape[0]
    x = jnp.transpose(x_nchw, (0, 2, 3, 1)).astype(jnp.float32)
    dn = ("NHWC", "HWIO", "NHWC")
    w1 = jnp.transpose(params["w1"], (2, 3, 1, 0)).astype(matmul_dtype)
    w2 = jnp.transpose(params["w2"], (2, 3, 1, 0)).astype(matmul_dtype)
    y = lax.conv_general_dilated(x.astype(matmul_dtype), w1, (stride, stride),
                                 ((1, 1), (1, 1)), dimension_numbers=dn,
                                 preferred_element_type=jnp.float32)
    y = jnp.maximum(_bn_train(y, params["g1"], params["b1"]), 0.0)
    y = lax.conv_general_dilated(y.astype(matmul_dtype), w2, (1, 1),
                                 ((1, 1), (1, 1)), dimension_numbers=dn,
                                 preferred_element_type=jnp.float32)
    y = _bn_train(y, params["g2"], params["b2"])
    xs = x.astype(matmul_dtype).astype(jnp.float32)   # kernel reads the skip from bf16 input
    if cin != cout or stride > 1:
        sk = xs[:, ::stride, ::stride, :]
        sk = jnp.pad(sk, ((0, 0), (0, 0), (0, 0), (0, cout - cin)))
    else:
        sk = xs
    out = jnp.maximum(y + sk, 0.0)
    return jnp.transpose(out, (0, 3, 1, 2))


# --------------------------------- main --------------------------------------

def _make_params(key, cin, cout):
    ks = jax.random.split(key, 6)
    return {
        "w1": 0.1 * jax.random.normal(ks[0], (cout, cin, 3, 3), jnp.float32),
        "g1": 1.0 + 0.1 * jax.random.normal(ks[1], (cout,), jnp.float32),
        "b1": 0.1 * jax.random.normal(ks[2], (cout,), jnp.float32),
        "w2": 0.1 * jax.random.normal(ks[3], (cout, cout, 3, 3), jnp.float32),
        "g2": 1.0 + 0.1 * jax.random.normal(ks[4], (cout,), jnp.float32),
        "b2": 0.1 * jax.random.normal(ks[5], (cout,), jnp.float32),
    }


def _check(out, x, params, stride):
    # Tight check vs a reference that applies the same bf16 rounding on the
    # MXU inputs (validates conv / BN / fusion / skip exactly), plus a looser
    # check vs the full-f32 module (tolerance relaxed because matmul inputs
    # are bf16, as recommended in the performance review).
    ref_bf = jax.block_until_ready(residual_block_reference(x, params, stride, jnp.bfloat16))
    ref_f32 = jax.block_until_ready(residual_block_reference(x, params, stride, jnp.float32))
    err_tight = float(jnp.max(jnp.abs(out - ref_bf)))
    err_loose = float(jnp.max(jnp.abs(out - ref_f32)))
    assert err_tight < 3e-3, err_tight
    assert err_loose < 1e-1, err_loose


if __name__ == "__main__":
    root = jax.random.PRNGKey(0)
    kx, kp1, kp2 = jax.random.split(root, 3)

    x = jax.random.normal(kx, (2, 4, 16, 16), jnp.float32)

    # Config 1: downsampling block (in=4 -> out=8, stride=2), like the homework.
    params = _make_params(kp1, cin=4, cout=8)
    out = jax.block_until_ready(residual_block_forward(x, params, stride=2))
    assert out.shape == (2, 8, 8, 8), out.shape
    _check(out, x, params, stride=2)

    # Config 2: identity-skip block (in=out=4, stride=1).
    params2 = _make_params(kp2, cin=4, cout=4)
    out2 = jax.block_until_ready(residual_block_forward(x, params2, stride=1))
    assert out2.shape == (2, 4, 16, 16), out2.shape
    _check(out2, x, params2, stride=1)

    # TODO(synk): BatchNorm running-stat (momentum) buffer updates are a training
    # side effect and are not modeled; normalization uses batch statistics like
    # PyTorch's default training-mode forward.
    print("KERNEL_OK")
</pallas_src>

<mosaic_0001>
module attributes {stable_mosaic.version = 11 : i64} {
  func.func @_conv_stats_kernel(%arg0: i32, %arg1: memref<1x4x9x9x128xbf16, #tpu.memory_space<vmem>>, %arg2: memref<9x128x128xbf16, #tpu.memory_space<vmem>>, %arg3: memref<1x8x8x128xf32, #tpu.memory_space<vmem>>, %arg4: memref<2x128xf32, #tpu.memory_space<vmem>>) attributes {dimension_semantics = [#tpu.dimension_semantics<arbitrary>], iteration_bounds = array<i64: 2>, scalar_prefetch = 0 : i64, scratch_operands = 0 : i64, tpu.core_type = #tpu.core_type<tc>, window_params = [{transform_indices = @transform_0, window_bounds = array<i64: 1, 4, 9, 9, 128>}, {pipeline_mode = #tpu.pipeline_mode<synchronous>, transform_indices = @transform_1, window_bounds = array<i64: 9, 128, 128>}, {transform_indices = @transform_2, window_bounds = array<i64: 1, 8, 8, 128>}, {pipeline_mode = #tpu.pipeline_mode<synchronous>, transform_indices = @transform_3, window_bounds = array<i64: 2, 128>}]} {
    %cst = arith.constant 0.000000e+00 : f32
    %0 = vector.broadcast %cst : f32 to vector<64x128xf32>
    %c0 = arith.constant 0 : index
    %c0_0 = arith.constant 0 : index
    %c0_1 = arith.constant 0 : index
    %c0_2 = arith.constant 0 : index
    %c0_3 = arith.constant 0 : index
    %1 = vector.load %arg1[%c0, %c0_0, %c0_1, %c0_2, %c0_3] : memref<1x4x9x9x128xbf16, #tpu.memory_space<vmem>>, vector<1x1x8x8x128xbf16>
    %2 = vector.shape_cast %1 : vector<1x1x8x8x128xbf16> to vector<64x128xbf16>
    %c0_4 = arith.constant 0 : index
    %c0_5 = arith.constant 0 : index
    %c0_6 = arith.constant 0 : index
    %3 = vector.load %arg2[%c0_4, %c0_5, %c0_6] : memref<9x128x128xbf16, #tpu.memory_space<vmem>>, vector<1x128x128xbf16>
    %4 = vector.shape_cast %3 : vector<1x128x128xbf16> to vector<128x128xbf16>
    %cst_7 = arith.constant dense<0.000000e+00> : vector<64x128xf32>
    %5 = tpu.matmul %2, %4, %cst_7 {dimension_numbers = #tpu.dot_dimension_numbers<[1], [0], [0], [1], [0, 0, 1, 1], [], []>} : vector<64x128xbf16>, vector<128x128xbf16>, vector<64x128xf32> -> vector<64x128xf32>
    %6 = arith.addf %0, %5 : vector<64x128xf32>
    %c0_8 = arith.constant 0 : index
    %c1 = arith.constant 1 : index
    %c0_9 = arith.constant 0 : index
    %c0_10 = arith.constant 0 : index
    %c0_11 = arith.constant 0 : index
    %7 = vector.load %arg1[%c0_8, %c1, %c0_9, %c0_10, %c0_11] : memref<1x4x9x9x128xbf16, #tpu.memory_space<vmem>>, vector<1x1x8x8x128xbf16>
    %8 = vector.shape_cast %7 : vector<1x1x8x8x128xbf16> to vector<64x128xbf16>
    %c1_12 = arith.constant 1 : index
    %c0_13 = arith.constant 0 : index
    %c0_14 = arith.constant 0 : index
    %9 = vector.load %arg2[%c1_12, %c0_13, %c0_14] : memref<9x128x128xbf16, #tpu.memory_space<vmem>>, vector<1x128x128xbf16>
    %10 = vector.shape_cast %9 : vector<1x128x128xbf16> to vector<128x128xbf16>
    %cst_15 = arith.constant dense<0.000000e+00> : vector<64x128xf32>
    %11 = tpu.matmul %8, %10, %cst_15 {dimension_numbers = #tpu.dot_dimension_numbers<[1], [0], [0], [1], [0, 0, 1, 1], [], []>} : vector<64x128xbf16>, vector<128x128xbf16>, vector<64x128xf32> -> vector<64x128xf32>
    %12 = arith.addf %6, %11 : vector<64x128xf32>
    %c0_16 = arith.constant 0 : index
    %c0_17 = arith.constant 0 : index
    %c0_18 = arith.constant 0 : index
    %c1_19 = arith.constant 1 : index
    %c0_20 = arith.constant 0 : index
    %13 = vector.load %arg1[%c0_16, %c0_17, %c0_18, %c1_19, %c0_20] : memref<1x4x9x9x128xbf16, #tpu.memory_space<vmem>>, vector<1x1x8x8x128xbf16>
    %14 = vector.shape_cast %13 : vector<1x1x8x8x128xbf16> to vector<64x128xbf16>
    %c2 = arith.constant 2 : index
    %c0_21 = arith.constant 0 : index
    %c0_22 = arith.constant 0 : index
    %15 = vector.load %arg2[%c2, %c0_21, %c0_22] : memref<9x128x128xbf16, #tpu.memory_space<vmem>>, vector<1x128x128xbf16>
    %16 = vector.shape_cast %15 : vector<1x128x128xbf16> to vector<128x128xbf16>
    %cst_23 = arith.constant dense<0.000000e+00> : vector<64x128xf32>
    %17 = tpu.matmul %14, %16, %cst_23 {dimension_numbers = #tpu.dot_dimension_numbers<[1], [0], [0], [1], [0, 0, 1, 1], [], []>} : vector<64x128xbf16>, vector<128x128xbf16>, vector<64x128xf32> -> vector<64x128xf32>
    %18 = arith.addf %12, %17 : vector<64x128xf32>
    %c0_24 = arith.constant 0 : index
    %c2_25 = arith.constant 2 : index
    %c0_26 = arith.constant 0 : index
    %c0_27 = arith.constant 0 : index
    %c0_28 = arith.constant 0 : index
    %19 = vector.load %arg1[%c0_24, %c2_25, %c0_26, %c0_27, %c0_28] : memref<1x4x9x9x128xbf16, #tpu.memory_space<vmem>>, vector<1x1x8x8x128xbf16>
    %20 = vector.shape_cast %19 : vector<1x1x8x8x128xbf16> to vector<64x128xbf16>
    %c3 = arith.constant 3 : index
    %c0_29 = arith.constant 0 : index
    %c0_30 = arith.constant 0 : index
    %21 = vector.load %arg2[%c3, %c0_29, %c0_30] : memref<9x128x128xbf16, #tpu.memory_space<vmem>>, vector<1x128x128xbf16>
    %22 = vector.shape_cast %21 : vector<1x128x128xbf16> to vector<128x128xbf16>
    %cst_31 = arith.constant dense<0.000000e+00> : vector<64x128xf32>
    %23 = tpu.matmul %20, %22, %cst_31 {dimension_numbers = #tpu.dot_dimension_numbers<[1], [0], [0], [1], [0, 0, 1, 1], [], []>} : vector<64x128xbf16>, vector<128x128xbf16>, vector<64x128xf32> -> vector<64x128xf32>
    %24 = arith.addf %18, %23 : vector<64x128xf32>
    %c0_32 = arith.constant 0 : index
    %c3_33 = arith.constant 3 : index
    %c0_34 = arith.constant 0 : index
    %c0_35 = arith.constant 0 : index
    %c0_36 = arith.constant 0 : index
    %25 = vector.load %arg1[%c0_32, %c3_33, %c0_34, %c0_35, %c0_36] : memref<1x4x9x9x128xbf16, #tpu.memory_space<vmem>>, vector<1x1x8x8x128xbf16>
    %26 = vector.shape_cast %25 : vector<1x1x8x8x128xbf16> to vector<64x128xbf16>
    %c4 = arith.constant 4 : index
    %c0_37 = arith.constant 0 : index
    %c0_38 = arith.constant 0 : index
    %27 = vector.load %arg2[%c4, %c0_37, %c0_38] : memref<9x128x128xbf16, #tpu.memory_space<vmem>>, vector<1x128x128xbf16>
    %28 = vector.shape_cast %27 : vector<1x128x128xbf16> to vector<128x128xbf16>
    %cst_39 = arith.constant dense<0.000000e+00> : vector<64x128xf32>
    %29 = tpu.matmul %26, %28, %cst_39 {dimension_numbers = #tpu.dot_dimension_numbers<[1], [0], [0], [1], [0, 0, 1, 1], [], []>} : vector<64x128xbf16>, vector<128x128xbf16>, vector<64x128xf32> -> vector<64x128xf32>
    %30 = arith.addf %24, %29 : vector<64x128xf32>
    %c0_40 = arith.constant 0 : index
    %c2_41 = arith.constant 2 : index
    %c0_42 = arith.constant 0 : index
    %c1_43 = arith.constant 1 : index
    %c0_44 = arith.constant 0 : index
    %31 = vector.load %arg1[%c0_40, %c2_41, %c0_42, %c1_43, %c0_44] : memref<1x4x9x9x128xbf16, #tpu.memory_space<vmem>>, vector<1x1x8x8x128xbf16>
    %32 = vector.shape_cast %31 : vector<1x1x8x8x128xbf16> to vector<64x128xbf16>
    %c5 = arith.constant 5 : index
    %c0_45 = arith.constant 0 : index
    %c0_46 = arith.constant 0 : index
    %33 = vector.load %arg2[%c5, %c0_45, %c0_46] : memref<9x128x128xbf16, #tpu.memory_space<vmem>>, vector<1x128x128xbf16>
    %34 = vector.shape_cast %33 : vector<1x128x128xbf16> to vector<128x128xbf16>
    %cst_47 = arith.constant dense<0.000000e+00> : vector<64x128xf32>
    %35 = tpu.matmul %32, %34, %cst_47 {dimension_numbers = #tpu.dot_dimension_numbers<[1], [0], [0], [1], [0, 0, 1, 1], [], []>} : vector<64x128xbf16>, vector<128x128xbf16>, vector<64x128xf32> -> vector<64x128xf32>
    %36 = arith.addf %30, %35 : vector<64x128xf32>
    %c0_48 = arith.constant 0 : index
    %c0_49 = arith.constant 0 : index
    %c1_50 = arith.constant 1 : index
    %c0_51 = arith.constant 0 : index
    %c0_52 = arith.constant 0 : index
    %37 = vector.load %arg1[%c0_48, %c0_49, %c1_50, %c0_51, %c0_52] : memref<1x4x9x9x128xbf16, #tpu.memory_space<vmem>>, vector<1x1x8x8x128xbf16>
    %38 = vector.shape_cast %37 : vector<1x1x8x8x128xbf16> to vector<64x128xbf16>
    %c6 = arith.constant 6 : index
    %c0_53 = arith.constant 0 : index
    %c0_54 = arith.constant 0 : index
    %39 = vector.load %arg2[%c6, %c0_53, %c0_54] : memref<9x128x128xbf16, #tpu.memory_space<vmem>>, vector<1x128x128xbf16>
    %40 = vector.shape_cast %39 : vector<1x128x128xbf16> to vector<128x128xbf16>
    %cst_55 = arith.constant dense<0.000000e+00> : vector<64x128xf32>
    %41 = tpu.matmul %38, %40, %cst_55 {dimension_numbers = #tpu.dot_dimension_numbers<[1], [0], [0], [1], [0, 0, 1, 1], [], []>} : vector<64x128xbf16>, vector<128x128xbf16>, vector<64x128xf32> -> vector<64x128xf32>
    %42 = arith.addf %36, %41 : vector<64x128xf32>
    %c0_56 = arith.constant 0 : index
    %c1_57 = arith.constant 1 : index
    %c1_58 = arith.constant 1 : index
    %c0_59 = arith.constant 0 : index
    %c0_60 = arith.constant 0 : index
    %43 = vector.load %arg1[%c0_56, %c1_57, %c1_58, %c0_59, %c0_60] : memref<1x4x9x9x128xbf16, #tpu.memory_space<vmem>>, vector<1x1x8x8x128xbf16>
    %44 = vector.shape_cast %43 : vector<1x1x8x8x128xbf16> to vector<64x128xbf16>
    %c7 = arith.constant 7 : index
    %c0_61 = arith.constant 0 : index
    %c0_62 = arith.constant 0 : index
    %45 = vector.load %arg2[%c7, %c0_61, %c0_62] : memref<9x128x128xbf16, #tpu.memory_space<vmem>>, vector<1x128x128xbf16>
    %46 = vector.shape_cast %45 : vector<1x128x128xbf16> to vector<128x128xbf16>
    %cst_63 = arith.constant dense<0.000000e+00> : vector<64x128xf32>
    %47 = tpu.matmul %44, %46, %cst_63 {dimension_numbers = #tpu.dot_dimension_numbers<[1], [0], [0], [1], [0, 0, 1, 1], [], []>} : vector<64x128xbf16>, vector<128x128xbf16>, vector<64x128xf32> -> vector<64x128xf32>
    %48 = arith.addf %42, %47 : vector<64x128xf32>
    %c0_64 = arith.constant 0 : index
    %c0_65 = arith.constant 0 : index
    %c1_66 = arith.constant 1 : index
    %c1_67 = arith.constant 1 : index
    %c0_68 = arith.constant 0 : index
    %49 = vector.load %arg1[%c0_64, %c0_65, %c1_66, %c1_67, %c0_68] : memref<1x4x9x9x128xbf16, #tpu.memory_space<vmem>>, vector<1x1x8x8x128xbf16>
    %50 = vector.shape_cast %49 : vector<1x1x8x8x128xbf16> to vector<64x128xbf16>
    %c8 = arith.constant 8 : index
    %c0_69 = arith.constant 0 : index
    %c0_70 = arith.constant 0 : index
    %51 = vector.load %arg2[%c8, %c0_69, %c0_70] : memref<9x128x128xbf16, #tpu.memory_space<vmem>>, vector<1x128x128xbf16>
    %52 = vector.shape_cast %51 : vector<1x128x128xbf16> to vector<128x128xbf16>
    %cst_71 = arith.constant dense<0.000000e+00> : vector<64x128xf32>
    %53 = tpu.matmul %50, %52, %cst_71 {dimension_numbers = #tpu.dot_dimension_numbers<[1], [0], [0], [1], [0, 0, 1, 1], [], []>} : vector<64x128xbf16>, vector<128x128xbf16>, vector<64x128xf32> -> vector<64x128xf32>
    %54 = arith.addf %48, %53 : vector<64x128xf32>
    %55 = vector.shape_cast %54 : vector<64x128xf32> to vector<1x8x8x128xf32>
    %c0_72 = arith.constant 0 : index
    %c0_73 = arith.constant 0 : index
    %c0_74 = arith.constant 0 : index
    %c0_75 = arith.constant 0 : index
    %56 = vector.load %arg3[%c0_72, %c0_73, %c0_74, %c0_75] : memref<1x8x8x128xf32, #tpu.memory_space<vmem>>, vector<1x8x8x128xf32>
    tpu.vector_store %arg3[%c0_72, %c0_73, %c0_74, %c0_75], %55 {strides = array<i32>} : memref<1x8x8x128xf32, #tpu.memory_space<vmem>>, vector<1x8x8x128xf32>,
    %c0_i32 = arith.constant 0 : i32
    %57 = arith.cmpi eq, %arg0, %c0_i32 : i32
    %58 = arith.extui %57 : i1 to i32
    %c0_i32_76 = arith.constant 0 : i32
    %59 = arith.cmpi ne, %58, %c0_i32_76 : i32
    scf.if %59 {
      %cst_83 = arith.constant 0.000000e+00 : f32
      %69 = vector.broadcast %cst_83 : f32 to vector<2x128xf32>
      %c0_84 = arith.constant 0 : index
      %c0_85 = arith.constant 0 : index
      %70 = vector.load %arg4[%c0_84, %c0_85] : memref<2x128xf32, #tpu.memory_space<vmem>>, vector<2x128xf32>
      tpu.vector_store %arg4[%c0_84, %c0_85], %69 {strides = array<i32>} : memref<2x128xf32, #tpu.memory_space<vmem>>, vector<2x128xf32>,
    } else {
    }
    %cst_77 = arith.constant dense<0.000000e+00> : vector<128xf32>
    %60 = vector.multi_reduction <add>, %54, %cst_77 [0] : vector<64x128xf32> to vector<128xf32>
    %61 = vector.shape_cast %60 : vector<128xf32> to vector<1x128xf32>
    %62 = arith.mulf %54, %54 : vector<64x128xf32>
    %cst_78 = arith.constant dense<0.000000e+00> : vector<128xf32>
    %63 = vector.multi_reduction <add>, %62, %cst_78 [0] : vector<64x128xf32> to vector<128xf32>
    %64 = vector.shape_cast %63 : vector<128xf32> to vector<1x128xf32>
    %c0_79 = arith.constant 0 : index
    %c0_80 = arith.constant 0 : index
    %65 = vector.load %arg4[%c0_79, %c0_80] : memref<2x128xf32, #tpu.memory_space<vmem>>, vector<2x128xf32>
    %66 = tpu.concatenate %61, %64 in 0 : vector<1x128xf32>, vector<1x128xf32> -> vector<2x128xf32>
    %67 = arith.addf %65, %66 : vector<2x128xf32>
    %c0_81 = arith.constant 0 : index
    %c0_82 = arith.constant 0 : index
    %68 = vector.load %arg4[%c0_81, %c0_82] : memref<2x128xf32, #tpu.memory_space<vmem>>, vector<2x128xf32>
    tpu.vector_store %arg4[%c0_81, %c0_82], %67 {strides = array<i32>} : memref<2x128xf32, #tpu.memory_space<vmem>>, vector<2x128xf32>,
    return
  }
  func.func @transform_0(%arg0: i32) -> (i32, i32, i32, i32, i32) {
    %c0_i32 = arith.constant 0 : i32
    %c0_i32_0 = arith.constant 0 : i32
    %c0_i32_1 = arith.constant 0 : i32
    %c0_i32_2 = arith.constant 0 : i32
    %c0_i32_3 = arith.constant 0 : i32
    return %arg0, %c0_i32, %c0_i32_0, %c0_i32_1, %c0_i32_2 : i32, i32, i32, i32, i32
  }
  func.func @transform_1(%arg0: i32) -> (i32, i32, i32) {
    %c0_i32 = arith.constant 0 : i32
    %c0_i32_0 = arith.constant 0 : i32
    %c0_i32_1 = arith.constant 0 : i32
    %c0_i32_2 = arith.constant 0 : i32
    return %c0_i32, %c0_i32_0, %c0_i32_1 : i32, i32, i32
  }
  func.func @transform_2(%arg0: i32) -> (i32, i32, i32, i32) {
    %c0_i32 = arith.constant 0 : i32
    %c0_i32_0 = arith.constant 0 : i32
    %c0_i32_1 = arith.constant 0 : i32
    %c0_i32_2 = arith.constant 0 : i32
    return %arg0, %c0_i32, %c0_i32_0, %c0_i32_1 : i32, i32, i32, i32
  }
  func.func @transform_3(%arg0: i32) -> (i32, i32) {
    %c0_i32 = arith.constant 0 : i32
    %c0_i32_0 = arith.constant 0 : i32
    %c0_i32_1 = arith.constant 0 : i32
    return %c0_i32, %c0_i32_0 : i32, i32
  }
}

</mosaic_0001>

<llo_original>
// kernel: tpu_custom_call.1
$region0: #{tpu_custom_call.1}
  #allocation0 [shape = 'u32[]', space=smem, size = 0x4, offset = 0x4, fixed_abs, tag = 'smem constant byte address 0x4 - core index']
  #allocation1 [shape = 'u32[72,128]{1,0:T(1,128)}', space=vmem, size = 0x9000, scoped, tag = 'internal scratch']
  %s0 = inlined_call_operand.vmem [shape: bf16[2,4,9,9,128], index: 0, kind: input, shape index: {}]
  %s1 = inlined_call_operand.vmem [shape: bf16[9,128,128], index: 1, kind: input, shape index: {}]
  %s2 = inlined_call_operand.hbm [shape: f32[2,8,8,128], index: 2, kind: output, shape index: {0}]
  %s3 = inlined_call_operand.hbm [shape: f32[2,128], index: 3, kind: output, shape index: {1}]
  %4 = xla_tuple %s2, %s3
  %s5 = sld [smem:[#allocation0]]
  $region53: #{tpu_custom_call.1} parent=0
    _
  %s7 = ssub.s32 1, %s5
  %s8 = scalar_select 0, %s7, %s5
  $region1: #{tpu_custom_call.1} parent=0
    #allocation2 [shape = 'u8[65536]{0}', space=vmem, size = 0x10000, scoped, tag = 'output window, operand 0']
    #allocation3 [shape = 's32[2]{0}', space=sflag, size = 0x8, scoped, tag = 'scoped memory for tpu_custom_call.1']
    #allocation4 [shape = 'u8[1024]{0}', space=vmem, size = 0x400, scoped, tag = 'output window, operand 1, single buffered']
    #allocation5 [shape = 's32[1]{0}', space=sflag, size = 0x4, scoped, tag = 'scoped memory for tpu_custom_call.1']
    %9 = vsyncpa [#allocation3], 0
    %s10 = scalar_lea.sflag [#allocation3], 1
    %11 = vsyncpa %s10, 0
    %12 = vsyncpa [#allocation5], 0
    loop: start=0, step=1, limit=4
    $region2: #{tpu_custom_call.1} parent=1 // loop_pre_header
      _
    $region3: #{tpu_custom_call.1} parent=1 // loop_header
      %s14 = sphi 0, %s18
      %p15 = scmp.ge.s32.totalorder %s14, 4
      %s24 = sphi 0, %s26
      %s27 = sphi 0, %s24
      %s28 = sphi 0, %s27
      %s44 = sphi 0, %s28
      %s48 = sphi 0, %s48
      %s50 = sphi 0, %s48
      %s51 = sphi 0, %s50
      %s65 = sphi 0, %s51
      %s71 = sphi 0, %s73
      %s74 = sphi 0, %s71
      %s75 = sphi 0, %s74
      %s91 = sphi 0, %s75
      %s95 = sphi 0, %s95
      %s97 = sphi 0, %s95
      %s98 = sphi 0, %s97
      %s112 = sphi 0, %s98
    $region4: #{tpu_custom_call.1} parent=1 // loop_header_branch
      %17 = sbr.rel (%p15) target = $region8
    $region5: #{tpu_custom_call.1} parent=1 // loop_body
      %s19 = ssub.s32 %s14, 1
      %s20 = ssub.s32 %s14, 2
      %s21 = sadd.s32 %s14, 1
      %s22 = ssub.s32 %s14, %s21
      %p23 = scmp.eq.s32.totalorder %s22, 0
      %s25 = sadd.s32 %s24, 1
      %s26 = scalar_select %p23, %s24, %s25
      %p29 = pneg %p23
      %p30 = scmp.eq.s32.totalorder %s14, 1
      %p31 = por %p29, %p30
      %p32 = scmp.ne.s32.totalorder %s24, %s27
      %p33 = scmp.eq.s32.totalorder %s14, 0
      %p34 = por %p32, %p33
      %p35 = scmp.ne.s32.totalorder %s24, %s27
      %p36 = scmp.eq.s32.totalorder %s19, 1
      %p37 = por %p35, %p36
      %p38 = scmp.ne.s32.totalorder %s27, %s28
      %p39 = scmp.eq.s32.totalorder %s19, 0
      %p40 = por %p38, %p39
      %p41 = scmp.ne.s32.totalorder %s27, %s28
      %p42 = scmp.eq.s32.totalorder %s20, 1
      %p43 = por %p41, %p42
      %p45 = scmp.ne.s32.totalorder %s28, %s44
      %p46 = scmp.eq.s32.totalorder %s20, 0
      %p47 = por %p45, %p46
      %s49 = sadd.s32 %s48, 1
      %p52 = scmp.eq.s32.totalorder %s14, 1
      %p53 = scmp.ne.s32.totalorder %s48, %s50
      %p54 = scmp.eq.s32.totalorder %s14, 0
      %p55 = por %p53, %p54
      %p56 = scmp.ne.s32.totalorder %s48, %s50
      %p57 = scmp.eq.s32.totalorder %s19, 1
      %p58 = por %p56, %p57
      %p59 = scmp.ne.s32.totalorder %s50, %s51
      %p60 = scmp.eq.s32.totalorder %s19, 0
      %p61 = por %p59, %p60
      %p62 = scmp.ne.s32.totalorder %s50, %s51
      %p63 = scmp.eq.s32.totalorder %s20, 1
      %p64 = por %p62, %p63
      %p66 = scmp.ne.s32.totalorder %s51, %s65
      %p67 = scmp.eq.s32.totalorder %s20, 0
      %p68 = por %p66, %p67
      %s69 = ssub.s32 %s14, %s21
      %p70 = scmp.eq.s32.totalorder %s69, 0
      %s72 = sadd.s32 %s71, 1
      %s73 = scalar_select %p70, %s71, %s72
      %p76 = pneg %p70
      %p77 = scmp.eq.s32.totalorder %s14, 1
      %p78 = por %p76, %p77
      %p79 = scmp.ne.s32.totalorder %s71, %s74
      %p80 = scmp.eq.s32.totalorder %s14, 0
      %p81 = por %p79, %p80
      %p82 = scmp.ne.s32.totalorder %s71, %s74
      %p83 = scmp.eq.s32.totalorder %s19, 1
      %p84 = por %p82, %p83
      %p85 = scmp.ne.s32.totalorder %s74, %s75
      %p86 = scmp.eq.s32.totalorder %s19, 0
      %p87 = por %p85, %p86
      %p88 = scmp.ne.s32.totalorder %s74, %s75
      %p89 = scmp.eq.s32.totalorder %s20, 1
      %p90 = por %p88, %p89
      %p92 = scmp.ne.s32.totalorder %s75, %s91
      %p93 = scmp.eq.s32.totalorder %s20, 0
      %p94 = por %p92, %p93
      %s96 = sadd.s32 %s95, 1
      %p99 = scmp.eq.s32.totalorder %s14, 1
      %p100 = scmp.ne.s32.totalorder %s95, %s97
      %p101 = scmp.eq.s32.totalorder %s14, 0
      %p102 = por %p100, %p101
      %p103 = scmp.ne.s32.totalorder %s95, %s97
      %p104 = scmp.eq.s32.totalorder %s19, 1
      %p105 = por %p103, %p104
      %p106 = scmp.ne.s32.totalorder %s97, %s98
      %p107 = scmp.eq.s32.totalorder %s19, 0
      %p108 = por %p106, %p107
      %p109 = scmp.ne.s32.totalorder %s97, %s98
      %p110 = scmp.eq.s32.totalorder %s20, 1
      %p111 = por %p109, %p110
      %p113 = scmp.ne.s32.totalorder %s98, %s112
      %p114 = scmp.eq.s32.totalorder %s20, 0
      %p115 = por %p113, %p114
      %p116 = scmp.le.s32.totalorder 1, %s14
      %p117 = scmp.lt.s32.totalorder %s14, 3
      %p118 = pnand %p116, %p117
      %p119 = pneg %p118
      // Predicated region
      $region9: #{tpu_custom_call.1} parent=5 // pred_check
        _
      $region10: #{tpu_custom_call.1} parent=5 // pred_check_branch
        %121 = sbr.rel (%p118) target = $region12
      $region11: #{tpu_custom_call.1} parent=5 // pred_region
        %s122 = ssub.s32 %s14, 1
        // Predicated region
        $region13: #{tpu_custom_call.1} parent=11 // pred_check
          %p123 = pneg %p61
        $region14: #{tpu_custom_call.1} parent=11 // pred_check_branch
          %125 = sbr.rel (%p123) target = $region16
        $region15: #{tpu_custom_call.1} parent=11 // pred_region
          _
        $region16: #{tpu_custom_call.1} parent=11 // pred_fallthru
          _
      $region12: #{tpu_custom_call.1} parent=5 // pred_fallthru
        _
      %p126 = scmp.lt.s32.totalorder %s14, 2
      // Predicated region
      $region17: #{tpu_custom_call.1} parent=5 // pred_check
        %p127 = pneg %p126
      $region18: #{tpu_custom_call.1} parent=5 // pred_check_branch
        %129 = sbr.rel (%p127) target = $region20
      $region19: #{tpu_custom_call.1} parent=5 // pred_region
        // Predicated region
        $region21: #{tpu_custom_call.1} parent=19 // pred_check
          %p130 = pneg %p34
        $region22: #{tpu_custom_call.1} parent=19 // pred_check_branch
          %132 = sbr.rel (%p130) target = $region24
        $region23: #{tpu_custom_call.1} parent=19 // pred_region
          %p133 = scmp.lt.s32.totalorder %s14, 1
          %s134 = scalar_select %p133, %s14, 1
          %s135 = smul.addr %s134, 72
          %s136 = smul.addr %s135, 4
          %s137 = scalar_lea.vmem %s0, %s136
        $region24: #{tpu_custom_call.1} parent=19 // pred_fallthru
          _
      $region20: #{tpu_custom_call.1} parent=5 // pred_fallthru
        _
      %p138 = scmp.le.s32.totalorder 1, %s14
      %p139 = scmp.lt.s32.totalorder %s14, 3
      %p140 = pnand %p138, %p139
      %p141 = pneg %p140
      // Predicated region
      $region25: #{tpu_custom_call.1} parent=5 // pred_check
        _
      $region26: #{tpu_custom_call.1} parent=5 // pred_check_branch
        %143 = sbr.rel (%p140) target = $region28
      $region27: #{tpu_custom_call.1} parent=5 // pred_region
        %s144 = ssub.s32 %s14, 1
        %p145 = scmp.lt.s32.totalorder %s19, 1
        %s146 = scalar_select %p145, %s19, 1
        %s147 = smul.addr %s146, 72
        %s148 = smul.addr %s147, 4
        %s149 = scalar_lea.vmem %s0, %s148
        %p150 = pneg %p40
        %p151 = pneg %p37
        %p152 = pneg %p61
        %p153 = pneg %p58
        %p154 = pneg %p87
        %p155 = pneg %p84
        %s156 = sand.u32 %s74, 1
        %s157 = scalar_lea.sflag [#allocation3], %s156
        %s158 = sand.u32 %s74, 1
        %s159 = smul.addr %s158, 64
        %s160 = scalar_lea.vmem [#allocation2], %s159
        %p161 = pneg %p108
        %p162 = pneg %p105
        %p163 = scmp.lt.s32.totalorder %s19, 1
        %s164 = scalar_select %p163, %s19, 1
        %s165 = smul.addr %s164, 72
        %s166 = smul.addr %s165, 4
        %s167 = scalar_lea.vmem %s0, %s166
        %v168 = vld [vmem:[%s167] sm:$0xf]
        %v169 = vld [vmem:[%s167 + $0x8] sm:$0xf]
        %v170 = vld [vmem:[%s167 + $0x10] sm:$0xf]
        %v171 = vld [vmem:[%s167 + $0x18] sm:$0xf]
        %v172 = vld [vmem:[%s167 + $0x20] sm:$0xf]
        %v173 = vld [vmem:[%s167 + $0x28] sm:$0xf]
        %v174 = vld [vmem:[%s167 + $0x30] sm:$0xf]
        %v175 = vld [vmem:[%s167 + $0x38] sm:$0xf]
        %v176 = vld [vmem:[%s1] sm:$0xf]
        %v177 = vld [vmem:[%s1 + $0x4] sm:$0xf]
        %v178 = vld [vmem:[%s1 + $0x8] sm:$0xf]
        %v179 = vld [vmem:[%s1 + $0xc] sm:$0xf]
        %v180 = vld [vmem:[%s1 + $0x10] sm:$0xf]
        %v181 = vld [vmem:[%s1 + $0x14] sm:$0xf]
        %v182 = vld [vmem:[%s1 + $0x18] sm:$0xf]
        %v183 = vld [vmem:[%s1 + $0x1c] sm:$0xf]
        %v184 = vld [vmem:[%s1 + $0x20] sm:$0xf]
        %v185 = vld [vmem:[%s1 + $0x24] sm:$0xf]
        %v186 = vld [vmem:[%s1 + $0x28] sm:$0xf]
        %v187 = vld [vmem:[%s1 + $0x2c] sm:$0xf]
        %v188 = vld [vmem:[%s1 + $0x30] sm:$0xf]
        %v189 = vld [vmem:[%s1 + $0x34] sm:$0xf]
        %v190 = vld [vmem:[%s1 + $0x38] sm:$0xf]
        %v191 = vld [vmem:[%s1 + $0x3c] sm:$0xf]
        %s192 = scalar_lea.vmem %s167, 72
        %v193 = vld [vmem:[%s192] sm:$0xf]
        %v194 = vld [vmem:[%s192 + $0x8] sm:$0xf]
        %v195 = vld [vmem:[%s192 + $0x10] sm:$0xf]
        %v196 = vld [vmem:[%s192 + $0x18] sm:$0xf]
        %v197 = vld [vmem:[%s192 + $0x20] sm:$0xf]
        %v198 = vld [vmem:[%s192 + $0x28] sm:$0xf]
        %v199 = vld [vmem:[%s192 + $0x30] sm:$0xf]
        %v200 = vld [vmem:[%s192 + $0x38] sm:$0xf]
        %s201 = scalar_lea.vmem %s1, 64
        %v202 = vld [vmem:[%s201] sm:$0xf]
        %v203 = vld [vmem:[%s201 + $0x4] sm:$0xf]
        %v204 = vld [vmem:[%s201 + $0x8] sm:$0xf]
        %v205 = vld [vmem:[%s201 + $0xc] sm:$0xf]
        %v206 = vld [vmem:[%s201 + $0x10] sm:$0xf]
        %v207 = vld [vmem:[%s201 + $0x14] sm:$0xf]
        %v208 = vld [vmem:[%s201 + $0x18] sm:$0xf]
        %v209 = vld [vmem:[%s201 + $0x1c] sm:$0xf]
        %v210 = vld [vmem:[%s201 + $0x20] sm:$0xf]
        %v211 = vld [vmem:[%s201 + $0x24] sm:$0xf]
        %v212 = vld [vmem:[%s201 + $0x28] sm:$0xf]
        %v213 = vld [vmem:[%s201 + $0x2c] sm:$0xf]
        %v214 = vld [vmem:[%s201 + $0x30] sm:$0xf]
        %v215 = vld [vmem:[%s201 + $0x34] sm:$0xf]
        %v216 = vld [vmem:[%s201 + $0x38] sm:$0xf]
        %v217 = vld [vmem:[%s201 + $0x3c] sm:$0xf]
        %v226 = vunpack.c.l.b16 %v193
        %v227 = vunpack.c.l.b16 %v194
        %v228 = vunpack.c.l.b16 %v195
        %v229 = vunpack.c.l.b16 %v196
        %v230 = vunpack.c.l.b16 %v197
        %v231 = vunpack.c.l.b16 %v198
        %v232 = vunpack.c.l.b16 %v199
        %v233 = vunpack.c.l.b16 %v200
        %v234 = vpack.c.b16 %v227, %v226
        %v235 = vpack.c.b16 %v229, %v228
        %v236 = vpack.c.b16 %v231, %v230
        %v237 = vpack.c.b16 %v233, %v232
        %v258 = vunpack.c.l.b16 %v202
        %v259 = vunpack.c.l.b16 %v203
        %v260 = vunpack.c.l.b16 %v204
        %v261 = vunpack.c.l.b16 %v205
        %v262 = vunpack.c.l.b16 %v206
        %v263 = vunpack.c.l.b16 %v207
        %v264 = vunpack.c.l.b16 %v208
        %v265 = vunpack.c.l.b16 %v209
        %v266 = vunpack.c.l.b16 %v210
        %v267 = vunpack.c.l.b16 %v211
        %v268 = vunpack.c.l.b16 %v212
        %v269 = vunpack.c.l.b16 %v213
        %v270 = vunpack.c.l.b16 %v214
        %v271 = vunpack.c.l.b16 %v215
        %v272 = vunpack.c.l.b16 %v216
        %v273 = vunpack.c.l.b16 %v217
        %v274 = vpack.c.b16 %v259, %v258
        %v275 = vpack.c.b16 %v261, %v260
        %v276 = vpack.c.b16 %v263, %v262
        %v277 = vpack.c.b16 %v265, %v264
        %v278 = vpack.c.b16 %v267, %v266
        %v279 = vpack.c.b16 %v269, %v268
        %v280 = vpack.c.b16 %v271, %v270
        %v281 = vpack.c.b16 %v273, %v272
        %290 = vmatpush.bf16.msra.mxu0 %v281
        %291 = vmatpush.bf16.msra.mxu0 %v280
        %292 = vmatpush.bf16.msra.mxu0 %v279
        %293 = vmatpush.bf16.msra.mxu0 %v278
        %294 = vmatpush.bf16.msra.mxu0 %v277
        %295 = vmatpush.bf16.msra.mxu0 %v276
        %296 = vmatpush.bf16.msra.mxu0 %v275
        %297 = vmatpush.bf16.msra.mxu0 %v274
        %298 = vmatmul.bf16.gmra.mxu0 %v234
        %v299 = vpop.f32.mrf.mxu0
        %v300 = vadd.f32 0.0, %v299
        %v301 = vpop.f32.mrf.mxu0
        %v302 = vadd.f32 0.0, %v301
        %303 = vmatmul.bf16.gmra.mxu0 %v235
        %v304 = vpop.f32.mrf.mxu0
        %v305 = vadd.f32 0.0, %v304
        %v306 = vpop.f32.mrf.mxu0
        %v307 = vadd.f32 0.0, %v306
        %308 = vmatmul.bf16.gmra.mxu0 %v236
        %v309 = vpop.f32.mrf.mxu0
        %v310 = vadd.f32 0.0, %v309
        %v311 = vpop.f32.mrf.mxu0
        %v312 = vadd.f32 0.0, %v311
        %313 = vmatmul.bf16.gmra.mxu0 %v237
        %v314 = vpop.f32.mrf.mxu0
        %v315 = vadd.f32 0.0, %v314
        %v316 = vpop.f32.mrf.mxu0
        %v317 = vadd.f32 0.0, %v316
        %318 = vdwg.mxu0
        %v327 = vunpack.c.l.b16 %v168
        %v328 = vunpack.c.l.b16 %v169
        %v329 = vunpack.c.l.b16 %v170
        %v330 = vunpack.c.l.b16 %v171
        %v331 = vunpack.c.l.b16 %v172
        %v332 = vunpack.c.l.b16 %v173
        %v333 = vunpack.c.l.b16 %v174
        %v334 = vunpack.c.l.b16 %v175
        %v335 = vpack.c.b16 %v328, %v327
        %v336 = vpack.c.b16 %v330, %v329
        %v337 = vpack.c.b16 %v332, %v331
        %v338 = vpack.c.b16 %v334, %v333
        %v359 = vunpack.c.l.b16 %v176
        %v360 = vunpack.c.l.b16 %v177
        %v361 = vunpack.c.l.b16 %v178
        %v362 = vunpack.c.l.b16 %v179
        %v363 = vunpack.c.l.b16 %v180
        %v364 = vunpack.c.l.b16 %v181
        %v365 = vunpack.c.l.b16 %v182
        %v366 = vunpack.c.l.b16 %v183
        %v367 = vunpack.c.l.b16 %v184
        %v368 = vunpack.c.l.b16 %v185
        %v369 = vunpack.c.l.b16 %v186
        %v370 = vunpack.c.l.b16 %v187
        %v371 = vunpack.c.l.b16 %v188
        %v372 = vunpack.c.l.b16 %v189
        %v373 = vunpack.c.l.b16 %v190
        %v374 = vunpack.c.l.b16 %v191
        %v375 = vpack.c.b16 %v360, %v359
        %v376 = vpack.c.b16 %v362, %v361
        %v377 = vpack.c.b16 %v364, %v363
        %v378 = vpack.c.b16 %v366, %v365
        %v379 = vpack.c.b16 %v368, %v367
        %v380 = vpack.c.b16 %v370, %v369
        %v381 = vpack.c.b16 %v372, %v371
        %v382 = vpack.c.b16 %v374, %v373
        %391 = vmatpush.bf16.msra.mxu0 %v382
        %392 = vmatpush.bf16.msra.mxu0 %v381
        %393 = vmatpush.bf16.msra.mxu0 %v380
        %394 = vmatpush.bf16.msra.mxu0 %v379
        %395 = vmatpush.bf16.msra.mxu0 %v378
        %396 = vmatpush.bf16.msra.mxu0 %v377
        %397 = vmatpush.bf16.msra.mxu0 %v376
        %398 = vmatpush.bf16.msra.mxu0 %v375
        %399 = vmatmul.bf16.gmra.mxu0 %v335
        %v400 = vpop.f32.mrf.mxu0
        %v401 = vadd.f32 %v300, %v400
        %v402 = vpop.f32.mrf.mxu0
        %v403 = vadd.f32 %v302, %v402
        %404 = vmatmul.bf16.gmra.mxu0 %v336
        %v405 = vpop.f32.mrf.mxu0
        %v406 = vadd.f32 %v305, %v405
        %v407 = vpop.f32.mrf.mxu0
        %v408 = vadd.f32 %v307, %v407
        %409 = vmatmul.bf16.gmra.mxu0 %v337
        %v410 = vpop.f32.mrf.mxu0
        %v411 = vadd.f32 %v310, %v410
        %v412 = vpop.f32.mrf.mxu0
        %v413 = vadd.f32 %v312, %v412
        %414 = vmatmul.bf16.gmra.mxu0 %v338
        %v415 = vpop.f32.mrf.mxu0
        %v416 = vadd.f32 %v315, %v415
        %v417 = vpop.f32.mrf.mxu0
        %v418 = vadd.f32 %v317, %v417
        %419 = vdwg.mxu0
        %v420 = vld [vmem:[%s167] sm:$0xf]
        %v421 = vld [vmem:[%s167 + $0x4] sm:$0x1]
        %v422 = vld [vmem:[%s167 + $0x8] sm:$0xf]
        %v423 = vld [vmem:[%s167 + $0xc] sm:$0x1]
        %v424 = vld [vmem:[%s167 + $0x10] sm:$0xf]
        %v425 = vld [vmem:[%s167 + $0x14] sm:$0x1]
        %v426 = vld [vmem:[%s167 + $0x18] sm:$0xf]
        %v427 = vld [vmem:[%s167 + $0x1c] sm:$0x1]
        %v428 = vld [vmem:[%s167 + $0x20] sm:$0xf]
        %v429 = vld [vmem:[%s167 + $0x24] sm:$0x1]
        %v430 = vld [vmem:[%s167 + $0x28] sm:$0xf]
        %v431 = vld [vmem:[%s167 + $0x2c] sm:$0x1]
        %v432 = vld [vmem:[%s167 + $0x30] sm:$0xf]
        %v433 = vld [vmem:[%s167 + $0x34] sm:$0x1]
        %v434 = vld [vmem:[%s167 + $0x38] sm:$0xf]
        %v435 = vld [vmem:[%s167 + $0x3c] sm:$0x1]
        %vm436 = vsmask.f32 3328
        %vm437 = vsmask.f32 7440
        %vm438 = vmor %vm436, %vm437
        %v440 = vshrl.u32 %v420, 16
        %v442 = vrot.slane %v440, 4
        %v443 = vshll.u32 %v420, 16
        %v445 = vrot.slane %v443, 5
        %v446 = vor.u32 %v442, %v445
        %v447 = vrot.slane %v446, 4
        %v449 = vshll.u32 %v421, 16
        %v451 = vrot.slane %v449, 5
        %v452 = vsel %vm438, %v447, %v451
        %v454 = vshrl.u32 %v422, 16
        %v456 = vrot.slane %v454, 4
        %v457 = vshll.u32 %v422, 16
        %v459 = vrot.slane %v457, 5
        %v460 = vor.u32 %v456, %v459
        %v461 = vrot.slane %v460, 4
        %v463 = vshll.u32 %v423, 16
        %v465 = vrot.slane %v463, 5
        %v466 = vsel %vm438, %v461, %v465
        %v468 = vshrl.u32 %v424, 16
        %v470 = vrot.slane %v468, 4
        %v471 = vshll.u32 %v424, 16
        %v473 = vrot.slane %v471, 5
        %v474 = vor.u32 %v470, %v473
        %v475 = vrot.slane %v474, 4
        %v477 = vshll.u32 %v425, 16
        %v479 = vrot.slane %v477, 5
        %v480 = vsel %vm438, %v475, %v479
        %v482 = vshrl.u32 %v426, 16
        %v484 = vrot.slane %v482, 4
        %v485 = vshll.u32 %v426, 16
        %v487 = vrot.slane %v485, 5
        %v488 = vor.u32 %v484, %v487
        %v489 = vrot.slane %v488, 4
        %v491 = vshll.u32 %v427, 16
        %v493 = vrot.slane %v491, 5
        %v494 = vsel %vm438, %v489, %v493
        %v496 = vshrl.u32 %v428, 16
        %v498 = vrot.slane %v496, 4
        %v499 = vshll.u32 %v428, 16
        %v501 = vrot.slane %v499, 5
        %v502 = vor.u32 %v498, %v501
        %v503 = vrot.slane %v502, 4
        %v505 = vshll.u32 %v429, 16
        %v507 = vrot.slane %v505, 5
        %v508 = vsel %vm438, %v503, %v507
        %v510 = vshrl.u32 %v430, 16
        %v512 = vrot.slane %v510, 4
        %v513 = vshll.u32 %v430, 16
        %v515 = vrot.slane %v513, 5
        %v516 = vor.u32 %v512, %v515
        %v517 = vrot.slane %v516, 4
        %v519 = vshll.u32 %v431, 16
        %v521 = vrot.slane %v519, 5
        %v522 = vsel %vm438, %v517, %v521
        %v524 = vshrl.u32 %v432, 16
        %v526 = vrot.slane %v524, 4
        %v527 = vshll.u32 %v432, 16
        %v529 = vrot.slane %v527, 5
        %v530 = vor.u32 %v526, %v529
        %v531 = vrot.slane %v530, 4
        %v533 = vshll.u32 %v433, 16
        %v535 = vrot.slane %v533, 5
        %v536 = vsel %vm438, %v531, %v535
        %v538 = vshrl.u32 %v434, 16
        %v540 = vrot.slane %v538, 4
        %v541 = vshll.u32 %v434, 16
        %v543 = vrot.slane %v541, 5
        %v544 = vor.u32 %v540, %v543
        %v545 = vrot.slane %v544, 4
        %v547 = vshll.u32 %v435, 16
        %v549 = vrot.slane %v547, 5
        %v550 = vsel %vm438, %v545, %v549
        %s551 = scalar_lea.vmem %s1, 128
        %v552 = vld [vmem:[%s551] sm:$0xf]
        %v553 = vld [vmem:[%s551 + $0x4] sm:$0xf]
        %v554 = vld [vmem:[%s551 + $0x8] sm:$0xf]
        %v555 = vld [vmem:[%s551 + $0xc] sm:$0xf]
        %v556 = vld [vmem:[%s551 + $0x10] sm:$0xf]
        %v557 = vld [vmem:[%s551 + $0x14] sm:$0xf]
        %v558 = vld [vmem:[%s551 + $0x18] sm:$0xf]
        %v559 = vld [vmem:[%s551 + $0x1c] sm:$0xf]
        %v560 = vld [vmem:[%s551 + $0x20] sm:$0xf]
        %v561 = vld [vmem:[%s551 + $0x24] sm:$0xf]
        %v562 = vld [vmem:[%s551 + $0x28] sm:$0xf]
        %v563 = vld [vmem:[%s551 + $0x2c] sm:$0xf]
        %v564 = vld [vmem:[%s551 + $0x30] sm:$0xf]
        %v565 = vld [vmem:[%s551 + $0x34] sm:$0xf]
        %v566 = vld [vmem:[%s551 + $0x38] sm:$0xf]
        %v567 = vld [vmem:[%s551 + $0x3c] sm:$0xf]
        %v568 = vunpack.c.l.b16 %v452
        %v569 = vunpack.c.l.b16 %v466
        %v570 = vunpack.c.l.b16 %v480
        %v571 = vunpack.c.l.b16 %v494
        %v572 = vunpack.c.l.b16 %v508
        %v573 = vunpack.c.l.b16 %v522
        %v574 = vunpack.c.l.b16 %v536
        %v575 = vunpack.c.l.b16 %v550
        %v576 = vpack.c.b16 %v569, %v568
        %v577 = vpack.c.b16 %v571, %v570
        %v578 = vpack.c.b16 %v573, %v572
        %v579 = vpack.c.b16 %v575, %v574
        %v600 = vunpack.c.l.b16 %v552
        %v601 = vunpack.c.l.b16 %v553
        %v602 = vunpack.c.l.b16 %v554
        %v603 = vunpack.c.l.b16 %v555
        %v604 = vunpack.c.l.b16 %v556
        %v605 = vunpack.c.l.b16 %v557
        %v606 = vunpack.c.l.b16 %v558
        %v607 = vunpack.c.l.b16 %v559
        %v608 = vunpack.c.l.b16 %v560
        %v609 = vunpack.c.l.b16 %v561
        %v610 = vunpack.c.l.b16 %v562
        %v611 = vunpack.c.l.b16 %v563
        %v612 = vunpack.c.l.b16 %v564
        %v613 = vunpack.c.l.b16 %v565
        %v614 = vunpack.c.l.b16 %v566
        %v615 = vunpack.c.l.b16 %v567
        %v616 = vpack.c.b16 %v601, %v600
        %v617 = vpack.c.b16 %v603, %v602
        %v618 = vpack.c.b16 %v605, %v604
        %v619 = vpack.c.b16 %v607, %v606
        %v620 = vpack.c.b16 %v609, %v608
        %v621 = vpack.c.b16 %v611, %v610
        %v622 = vpack.c.b16 %v613, %v612
        %v623 = vpack.c.b16 %v615, %v614
        %632 = vmatpush.bf16.msra.mxu0 %v623
        %633 = vmatpush.bf16.msra.mxu0 %v622
        %634 = vmatpush.bf16.msra.mxu0 %v621
        %635 = vmatpush.bf16.msra.mxu0 %v620
        %636 = vmatpush.bf16.msra.mxu0 %v619
        %637 = vmatpush.bf16.msra.mxu0 %v618
        %638 = vmatpush.bf16.msra.mxu0 %v617
        %639 = vmatpush.bf16.msra.mxu0 %v616
        %640 = vmatmul.bf16.gmra.mxu0 %v576
        %v641 = vpop.f32.mrf.mxu0
        %v642 = vadd.f32 0.0, %v641
        %v643 = vpop.f32.mrf.mxu0
        %v644 = vadd.f32 0.0, %v643
        %645 = vmatmul.bf16.gmra.mxu0 %v577
        %v646 = vpop.f32.mrf.mxu0
        %v647 = vadd.f32 0.0, %v646
        %v648 = vpop.f32.mrf.mxu0
        %v649 = vadd.f32 0.0, %v648
        %650 = vmatmul.bf16.gmra.mxu0 %v578
        %v651 = vpop.f32.mrf.mxu0
        %v652 = vadd.f32 0.0, %v651
        %v653 = vpop.f32.mrf.mxu0
        %v654 = vadd.f32 0.0, %v653
        %655 = vmatmul.bf16.gmra.mxu0 %v579
        %v656 = vpop.f32.mrf.mxu0
        %v657 = vadd.f32 0.0, %v656
        %v658 = vpop.f32.mrf.mxu0
        %v659 = vadd.f32 0.0, %v658
        %660 = vdwg.mxu0
        %v661 = vadd.f32 %v401, %v642
        %v662 = vadd.f32 %v403, %v644
        %v663 = vadd.f32 %v406, %v647
        %v664 = vadd.f32 %v408, %v649
        %v665 = vadd.f32 %v411, %v652
        %v666 = vadd.f32 %v413, %v654
        %v667 = vadd.f32 %v416, %v657
        %v668 = vadd.f32 %v418, %v659
        %s669 = scalar_lea.vmem %s167, 144
        %v670 = vld [vmem:[%s669] sm:$0xf]
        %v671 = vld [vmem:[%s669 + $0x8] sm:$0xf]
        %v672 = vld [vmem:[%s669 + $0x10] sm:$0xf]
        %v673 = vld [vmem:[%s669 + $0x18] sm:$0xf]
        %v674 = vld [vmem:[%s669 + $0x20] sm:$0xf]
        %v675 = vld [vmem:[%s669 + $0x28] sm:$0xf]
        %v676 = vld [vmem:[%s669 + $0x30] sm:$0xf]
        %v677 = vld [vmem:[%s669 + $0x38] sm:$0xf]
        %s678 = scalar_lea.vmem %s1, 192
        %v679 = vld [vmem:[%s678] sm:$0xf]
        %v680 = vld [vmem:[%s678 + $0x4] sm:$0xf]
        %v681 = vld [vmem:[%s678 + $0x8] sm:$0xf]
        %v682 = vld [vmem:[%s678 + $0xc] sm:$0xf]
        %v683 = vld [vmem:[%s678 + $0x10] sm:$0xf]
        %v684 = vld [vmem:[%s678 + $0x14] sm:$0xf]
        %v685 = vld [vmem:[%s678 + $0x18] sm:$0xf]
        %v686 = vld [vmem:[%s678 + $0x1c] sm:$0xf]
        %v687 = vld [vmem:[%s678 + $0x20] sm:$0xf]
        %v688 = vld [vmem:[%s678 + $0x24] sm:$0xf]
        %v689 = vld [vmem:[%s678 + $0x28] sm:$0xf]
        %v690 = vld [vmem:[%s678 + $0x2c] sm:$0xf]
        %v691 = vld [vmem:[%s678 + $0x30] sm:$0xf]
        %v692 = vld [vmem:[%s678 + $0x34] sm:$0xf]
        %v693 = vld [vmem:[%s678 + $0x38] sm:$0xf]
        %v694 = vld [vmem:[%s678 + $0x3c] sm:$0xf]
        %v703 = vunpack.c.l.b16 %v670
        %v704 = vunpack.c.l.b16 %v671
        %v705 = vunpack.c.l.b16 %v672
        %v706 = vunpack.c.l.b16 %v673
        %v707 = vunpack.c.l.b16 %v674
        %v708 = vunpack.c.l.b16 %v675
        %v709 = vunpack.c.l.b16 %v676
        %v710 = vunpack.c.l.b16 %v677
        %v711 = vpack.c.b16 %v704, %v703
        %v712 = vpack.c.b16 %v706, %v705
        %v713 = vpack.c.b16 %v708, %v707
        %v714 = vpack.c.b16 %v710, %v709
        %v735 = vunpack.c.l.b16 %v679
        %v736 = vunpack.c.l.b16 %v680
        %v737 = vunpack.c.l.b16 %v681
        %v738 = vunpack.c.l.b16 %v682
        %v739 = vunpack.c.l.b16 %v683
        %v740 = vunpack.c.l.b16 %v684
        %v741 = vunpack.c.l.b16 %v685
        %v742 = vunpack.c.l.b16 %v686
        %v743 = vunpack.c.l.b16 %v687
        %v744 = vunpack.c.l.b16 %v688
        %v745 = vunpack.c.l.b16 %v689
        %v746 = vunpack.c.l.b16 %v690
        %v747 = vunpack.c.l.b16 %v691
        %v748 = vunpack.c.l.b16 %v692
        %v749 = vunpack.c.l.b16 %v693
        %v750 = vunpack.c.l.b16 %v694
        %v751 = vpack.c.b16 %v736, %v735
        %v752 = vpack.c.b16 %v738, %v737
        %v753 = vpack.c.b16 %v740, %v739
        %v754 = vpack.c.b16 %v742, %v741
        %v755 = vpack.c.b16 %v744, %v743
        %v756 = vpack.c.b16 %v746, %v745
        %v757 = vpack.c.b16 %v748, %v747
        %v758 = vpack.c.b16 %v750, %v749
        %767 = vmatpush.bf16.msra.mxu0 %v758
        %768 = vmatpush.bf16.msra.mxu0 %v757
        %769 = vmatpush.bf16.msra.mxu0 %v756
        %770 = vmatpush.bf16.msra.mxu0 %v755
        %771 = vmatpush.bf16.msra.mxu0 %v754
        %772 = vmatpush.bf16.msra.mxu0 %v753
        %773 = vmatpush.bf16.msra.mxu0 %v752
        %774 = vmatpush.bf16.msra.mxu0 %v751
        %775 = vmatmul.bf16.gmra.mxu0 %v711
        %v776 = vpop.f32.mrf.mxu0
        %v777 = vadd.f32 0.0, %v776
        %v778 = vpop.f32.mrf.mxu0
        %v779 = vadd.f32 0.0, %v778
        %780 = vmatmul.bf16.gmra.mxu0 %v712
        %v781 = vpop.f32.mrf.mxu0
        %v782 = vadd.f32 0.0, %v781
        %v783 = vpop.f32.mrf.mxu0
        %v784 = vadd.f32 0.0, %v783
        %785 = vmatmul.bf16.gmra.mxu0 %v713
        %v786 = vpop.f32.mrf.mxu0
        %v787 = vadd.f32 0.0, %v786
        %v788 = vpop.f32.mrf.mxu0
        %v789 = vadd.f32 0.0, %v788
        %790 = vmatmul.bf16.gmra.mxu0 %v714
        %v791 = vpop.f32.mrf.mxu0
        %v792 = vadd.f32 0.0, %v791
        %v793 = vpop.f32.mrf.mxu0
        %v794 = vadd.f32 0.0, %v793
        %795 = vdwg.mxu0
        %v796 = vadd.f32 %v661, %v777
        %v797 = vadd.f32 %v662, %v779
        %v798 = vadd.f32 %v663, %v782
        %v799 = vadd.f32 %v664, %v784
        %v800 = vadd.f32 %v665, %v787
        %v801 = vadd.f32 %v666, %v789
        %v802 = vadd.f32 %v667, %v792
        %v803 = vadd.f32 %v668, %v794
        %s804 = scalar_lea.vmem %s167, 216
        %v805 = vld [vmem:[%s804] sm:$0xf]
        %v806 = vld [vmem:[%s804 + $0x8] sm:$0xf]
        %v807 = vld [vmem:[%s804 + $0x10] sm:$0xf]
        %v808 = vld [vmem:[%s804 + $0x18] sm:$0xf]
        %v809 = vld [vmem:[%s804 + $0x20] sm:$0xf]
        %v810 = vld [vmem:[%s804 + $0x28] sm:$0xf]
        %v811 = vld [vmem:[%s804 + $0x30] sm:$0xf]
        %v812 = vld [vmem:[%s804 + $0x38] sm:$0xf]
        %s813 = scalar_lea.vmem %s1, 256
        %v814 = vld [vmem:[%s813] sm:$0xf]
        %v815 = vld [vmem:[%s813 + $0x4] sm:$0xf]
        %v816 = vld [vmem:[%s813 + $0x8] sm:$0xf]
        %v817 = vld [vmem:[%s813 + $0xc] sm:$0xf]
        %v818 = vld [vmem:[%s813 + $0x10] sm:$0xf]
        %v819 = vld [vmem:[%s813 + $0x14] sm:$0xf]
        %v820 = vld [vmem:[%s813 + $0x18] sm:$0xf]
        %v821 = vld [vmem:[%s813 + $0x1c] sm:$0xf]
        %v822 = vld [vmem:[%s813 + $0x20] sm:$0xf]
        %v823 = vld [vmem:[%s813 + $0x24] sm:$0xf]
        %v824 = vld [vmem:[%s813 + $0x28] sm:$0xf]
        %v825 = vld [vmem:[%s813 + $0x2c] sm:$0xf]
        %v826 = vld [vmem:[%s813 + $0x30] sm:$0xf]
        %v827 = vld [vmem:[%s813 + $0x34] sm:$0xf]
        %v828 = vld [vmem:[%s813 + $0x38] sm:$0xf]
        %v829 = vld [vmem:[%s813 + $0x3c] sm:$0xf]
        %v838 = vunpack.c.l.b16 %v805
        %v839 = vunpack.c.l.b16 %v806
        %v840 = vunpack.c.l.b16 %v807
        %v841 = vunpack.c.l.b16 %v808
        %v842 = vunpack.c.l.b16 %v809
        %v843 = vunpack.c.l.b16 %v810
        %v844 = vunpack.c.l.b16 %v811
        %v845 = vunpack.c.l.b16 %v812
        %v846 = vpack.c.b16 %v839, %v838
        %v847 = vpack.c.b16 %v841, %v840
        %v848 = vpack.c.b16 %v843, %v842
        %v849 = vpack.c.b16 %v845, %v844
        %v870 = vunpack.c.l.b16 %v814
        %v871 = vunpack.c.l.b16 %v815
        %v872 = vunpack.c.l.b16 %v816
        %v873 = vunpack.c.l.b16 %v817
        %v874 = vunpack.c.l.b16 %v818
        %v875 = vunpack.c.l.b16 %v819
        %v876 = vunpack.c.l.b16 %v820
        %v877 = vunpack.c.l.b16 %v821
        %v878 = vunpack.c.l.b16 %v822
        %v879 = vunpack.c.l.b16 %v823
        %v880 = vunpack.c.l.b16 %v824
        %v881 = vunpack.c.l.b16 %v825
        %v882 = vunpack.c.l.b16 %v826
        %v883 = vunpack.c.l.b16 %v827
        %v884 = vunpack.c.l.b16 %v828
        %v885 = vunpack.c.l.b16 %v829
        %v886 = vpack.c.b16 %v871, %v870
        %v887 = vpack.c.b16 %v873, %v872
        %v888 = vpack.c.b16 %v875, %v874
        %v889 = vpack.c.b16 %v877, %v876
        %v890 = vpack.c.b16 %v879, %v878
        %v891 = vpack.c.b16 %v881, %v880
        %v892 = vpack.c.b16 %v883, %v882
        %v893 = vpack.c.b16 %v885, %v884
        %902 = vmatpush.bf16.msra.mxu0 %v893
        %903 = vmatpush.bf16.msra.mxu0 %v892
        %904 = vmatpush.bf16.msra.mxu0 %v891
        %905 = vmatpush.bf16.msra.mxu0 %v890
        %906 = vmatpush.bf16.msra.mxu0 %v889
        %907 = vmatpush.bf16.msra.mxu0 %v888
        %908 = vmatpush.bf16.msra.mxu0 %v887
        %909 = vmatpush.bf16.msra.mxu0 %v886
        %910 = vmatmul.bf16.gmra.mxu0 %v846
        %v911 = vpop.f32.mrf.mxu0
        %v912 = vadd.f32 0.0, %v911
        %v913 = vpop.f32.mrf.mxu0
        %v914 = vadd.f32 0.0, %v913
        %915 = vmatmul.bf16.gmra.mxu0 %v847
        %v916 = vpop.f32.mrf.mxu0
        %v917 = vadd.f32 0.0, %v916
        %v918 = vpop.f32.mrf.mxu0
        %v919 = vadd.f32 0.0, %v918
        %920 = vmatmul.bf16.gmra.mxu0 %v848
        %v921 = vpop.f32.mrf.mxu0
        %v922 = vadd.f32 0.0, %v921
        %v923 = vpop.f32.mrf.mxu0
        %v924 = vadd.f32 0.0, %v923
        %925 = vmatmul.bf16.gmra.mxu0 %v849
        %v926 = vpop.f32.mrf.mxu0
        %v927 = vadd.f32 0.0, %v926
        %v928 = vpop.f32.mrf.mxu0
        %v929 = vadd.f32 0.0, %v928
        %930 = vdwg.mxu0
        %v931 = vadd.f32 %v796, %v912
        %v932 = vadd.f32 %v797, %v914
        %v933 = vadd.f32 %v798, %v917
        %v934 = vadd.f32 %v799, %v919
        %v935 = vadd.f32 %v800, %v922
        %v936 = vadd.f32 %v801, %v924
        %v937 = vadd.f32 %v802, %v927
        %v938 = vadd.f32 %v803, %v929
        %v939 = vld [vmem:[%s669] sm:$0xf]
        %v940 = vld [vmem:[%s669 + $0x4] sm:$0x1]
        %v941 = vld [vmem:[%s669 + $0x8] sm:$0xf]
        %v942 = vld [vmem:[%s669 + $0xc] sm:$0x1]
        %v943 = vld [vmem:[%s669 + $0x10] sm:$0xf]
        %v944 = vld [vmem:[%s669 + $0x14] sm:$0x1]
        %v945 = vld [vmem:[%s669 + $0x18] sm:$0xf]
        %v946 = vld [vmem:[%s669 + $0x1c] sm:$0x1]
        %v947 = vld [vmem:[%s669 + $0x20] sm:$0xf]
        %v948 = vld [vmem:[%s669 + $0x24] sm:$0x1]
        %v949 = vld [vmem:[%s669 + $0x28] sm:$0xf]
        %v950 = vld [vmem:[%s669 + $0x2c] sm:$0x1]
        %v951 = vld [vmem:[%s669 + $0x30] sm:$0xf]
        %v952 = vld [vmem:[%s669 + $0x34] sm:$0x1]
        %v953 = vld [vmem:[%s669 + $0x38] sm:$0xf]
        %v954 = vld [vmem:[%s669 + $0x3c] sm:$0x1]
        %v956 = vshrl.u32 %v939, 16
        %v958 = vrot.slane %v956, 4
        %v959 = vshll.u32 %v939, 16
        %v961 = vrot.slane %v959, 5
        %v962 = vor.u32 %v958, %v961
        %v963 = vrot.slane %v962, 4
        %v965 = vshll.u32 %v940, 16
        %v967 = vrot.slane %v965, 5
        %v968 = vsel %vm438, %v963, %v967
        %v970 = vshrl.u32 %v941, 16
        %v972 = vrot.slane %v970, 4
        %v973 = vshll.u32 %v941, 16
        %v975 = vrot.slane %v973, 5
        %v976 = vor.u32 %v972, %v975
        %v977 = vrot.slane %v976, 4
        %v979 = vshll.u32 %v942, 16
        %v981 = vrot.slane %v979, 5
        %v982 = vsel %vm438, %v977, %v981
        %v984 = vshrl.u32 %v943, 16
        %v986 = vrot.slane %v984, 4
        %v987 = vshll.u32 %v943, 16
        %v989 = vrot.slane %v987, 5
        %v990 = vor.u32 %v986, %v989
        %v991 = vrot.slane %v990, 4
        %v993 = vshll.u32 %v944, 16
        %v995 = vrot.slane %v993, 5
        %v996 = vsel %vm438, %v991, %v995
        %v998 = vshrl.u32 %v945, 16
        %v1000 = vrot.slane %v998, 4
        %v1001 = vshll.u32 %v945, 16
        %v1003 = vrot.slane %v1001, 5
        %v1004 = vor.u32 %v1000, %v1003
        %v1005 = vrot.slane %v1004, 4
        %v1007 = vshll.u32 %v946, 16
        %v1009 = vrot.slane %v1007, 5
        %v1010 = vsel %vm438, %v1005, %v1009
        %v1012 = vshrl.u32 %v947, 16
        %v1014 = vrot.slane %v1012, 4
        %v1015 = vshll.u32 %v947, 16
        %v1017 = vrot.slane %v1015, 5
        %v1018 = vor.u32 %v1014, %v1017
        %v1019 = vrot.slane %v1018, 4
        %v1021 = vshll.u32 %v948, 16
        %v1023 = vrot.slane %v1021, 5
        %v1024 = vsel %vm438, %v1019, %v1023
        %v1026 = vshrl.u32 %v949, 16
        %v1028 = vrot.slane %v1026, 4
        %v1029 = vshll.u32 %v949, 16
        %v1031 = vrot.slane %v1029, 5
        %v1032 = vor.u32 %v1028, %v1031
        %v1033 = vrot.slane %v1032, 4
        %v1035 = vshll.u32 %v950, 16
        %v1037 = vrot.slane %v1035, 5
        %v1038 = vsel %vm438, %v1033, %v1037
        %v1040 = vshrl.u32 %v951, 16
        %v1042 = vrot.slane %v1040, 4
        %v1043 = vshll.u32 %v951, 16
        %v1045 = vrot.slane %v1043, 5
        %v1046 = vor.u32 %v1042, %v1045
        %v1047 = vrot.slane %v1046, 4
        %v1049 = vshll.u32 %v952, 16
        %v1051 = vrot.slane %v1049, 5
        %v1052 = vsel %vm438, %v1047, %v1051
        %v1054 = vshrl.u32 %v953, 16
        %v1056 = vrot.slane %v1054, 4
        %v1057 = vshll.u32 %v953, 16
        %v1059 = vrot.slane %v1057, 5
        %v1060 = vor.u32 %v1056, %v1059
        %v1061 = vrot.slane %v1060, 4
        %v1063 = vshll.u32 %v954, 16
        %v1065 = vrot.slane %v1063, 5
        %v1066 = vsel %vm438, %v1061, %v1065
        %s1067 = scalar_lea.vmem %s1, 320
        %v1068 = vld [vmem:[%s1067] sm:$0xf]
        %v1069 = vld [vmem:[%s1067 + $0x4] sm:$0xf]
        %v1070 = vld [vmem:[%s1067 + $0x8] sm:$0xf]
        %v1071 = vld [vmem:[%s1067 + $0xc] sm:$0xf]
        %v1072 = vld [vmem:[%s1067 + $0x10] sm:$0xf]
        %v1073 = vld [vmem:[%s1067 + $0x14] sm:$0xf]
        %v1074 = vld [vmem:[%s1067 + $0x18] sm:$0xf]
        %v1075 = vld [vmem:[%s1067 + $0x1c] sm:$0xf]
        %v1076 = vld [vmem:[%s1067 + $0x20] sm:$0xf]
        %v1077 = vld [vmem:[%s1067 + $0x24] sm:$0xf]
        %v1078 = vld [vmem:[%s1067 + $0x28] sm:$0xf]
        %v1079 = vld [vmem:[%s1067 + $0x2c] sm:$0xf]
        %v1080 = vld [vmem:[%s1067 + $0x30] sm:$0xf]
        %v1081 = vld [vmem:[%s1067 + $0x34] sm:$0xf]
        %v1082 = vld [vmem:[%s1067 + $0x38] sm:$0xf]
        %v1083 = vld [vmem:[%s1067 + $0x3c] sm:$0xf]
        %v1084 = vunpack.c.l.b16 %v968
        %v1085 = vunpack.c.l.b16 %v982
        %v1086 = vunpack.c.l.b16 %v996
        %v1087 = vunpack.c.l.b16 %v1010
        %v1088 = vunpack.c.l.b16 %v1024
        %v1089 = vunpack.c.l.b16 %v1038
        %v1090 = vunpack.c.l.b16 %v1052
        %v1091 = vunpack.c.l.b16 %v1066
        %v1092 = vpack.c.b16 %v1085, %v1084
        %v1093 = vpack.c.b16 %v1087, %v1086
        %v1094 = vpack.c.b16 %v1089, %v1088
        %v1095 = vpack.c.b16 %v1091, %v1090
        %v1116 = vunpack.c.l.b16 %v1068
        %v1117 = vunpack.c.l.b16 %v1069
        %v1118 = vunpack.c.l.b16 %v1070
        %v1119 = vunpack.c.l.b16 %v1071
        %v1120 = vunpack.c.l.b16 %v1072
        %v1121 = vunpack.c.l.b16 %v1073
        %v1122 = vunpack.c.l.b16 %v1074
        %v1123 = vunpack.c.l.b16 %v1075
        %v1124 = vunpack.c.l.b16 %v1076
        %v1125 = vunpack.c.l.b16 %v1077
        %v1126 = vunpack.c.l.b16 %v1078
        %v1127 = vunpack.c.l.b16 %v1079
        %v1128 = vunpack.c.l.b16 %v1080
        %v1129 = vunpack.c.l.b16 %v1081
        %v1130 = vunpack.c.l.b16 %v1082
        %v1131 = vunpack.c.l.b16 %v1083
        %v1132 = vpack.c.b16 %v1117, %v1116
        %v1133 = vpack.c.b16 %v1119, %v1118
        %v1134 = vpack.c.b16 %v1121, %v1120
        %v1135 = vpack.c.b16 %v1123, %v1122
        %v1136 = vpack.c.b16 %v1125, %v1124
        %v1137 = vpack.c.b16 %v1127, %v1126
        %v1138 = vpack.c.b16 %v1129, %v1128
        %v1139 = vpack.c.b16 %v1131, %v1130
        %1148 = vmatpush.bf16.msra.mxu0 %v1139
        %1149 = vmatpush.bf16.msra.mxu0 %v1138
        %1150 = vmatpush.bf16.msra.mxu0 %v1137
        %1151 = vmatpush.bf16.msra.mxu0 %v1136
        %1152 = vmatpush.bf16.msra.mxu0 %v1135
        %1153 = vmatpush.bf16.msra.mxu0 %v1134
        %1154 = vmatpush.bf16.msra.mxu0 %v1133
        %1155 = vmatpush.bf16.msra.mxu0 %v1132
        %1156 = vmatmul.bf16.gmra.mxu0 %v1092
        %v1157 = vpop.f32.mrf.mxu0
        %v1158 = vadd.f32 0.0, %v1157
        %v1159 = vpop.f32.mrf.mxu0
        %v1160 = vadd.f32 0.0, %v1159
        %1161 = vmatmul.bf16.gmra.mxu0 %v1093
        %v1162 = vpop.f32.mrf.mxu0
        %v1163 = vadd.f32 0.0, %v1162
        %v1164 = vpop.f32.mrf.mxu0
        %v1165 = vadd.f32 0.0, %v1164
        %1166 = vmatmul.bf16.gmra.mxu0 %v1094
        %v1167 = vpop.f32.mrf.mxu0
        %v1168 = vadd.f32 0.0, %v1167
        %v1169 = vpop.f32.mrf.mxu0
        %v1170 = vadd.f32 0.0, %v1169
        %1171 = vmatmul.bf16.gmra.mxu0 %v1095
        %v1172 = vpop.f32.mrf.mxu0
        %v1173 = vadd.f32 0.0, %v1172
        %v1174 = vpop.f32.mrf.mxu0
        %v1175 = vadd.f32 0.0, %v1174
        %1176 = vdwg.mxu0
        %v1177 = vadd.f32 %v931, %v1158
        %v1178 = vadd.f32 %v932, %v1160
        %v1179 = vadd.f32 %v933, %v1163
        %v1180 = vadd.f32 %v934, %v1165
        %v1181 = vadd.f32 %v935, %v1168
        %v1182 = vadd.f32 %v936, %v1170
        %v1183 = vadd.f32 %v937, %v1173
        %v1184 = vadd.f32 %v938, %v1175
        %s1185 = scalar_lea.vmem %s167, 8
        %v1186 = vld [vmem:[%s1185] sm:$0xf]
        %v1187 = vld [vmem:[%s1185 + $0x8] sm:$0xf]
        %v1188 = vld [vmem:[%s1185 + $0x10] sm:$0xf]
        %v1189 = vld [vmem:[%s1185 + $0x18] sm:$0xf]
        %v1190 = vld [vmem:[%s1185 + $0x20] sm:$0xf]
        %v1191 = vld [vmem:[%s1185 + $0x28] sm:$0xf]
        %v1192 = vld [vmem:[%s1185 + $0x30] sm:$0xf]
        %v1193 = vld [vmem:[%s1185 + $0x38] sm:$0xf]
        %s1194 = scalar_lea.vmem %s1, 384
        %v1195 = vld [vmem:[%s1194] sm:$0xf]
        %v1196 = vld [vmem:[%s1194 + $0x4] sm:$0xf]
        %v1197 = vld [vmem:[%s1194 + $0x8] sm:$0xf]
        %v1198 = vld [vmem:[%s1194 + $0xc] sm:$0xf]
        %v1199 = vld [vmem:[%s1194 + $0x10] sm:$0xf]
        %v1200 = vld [vmem:[%s1194 + $0x14] sm:$0xf]
        %v1201 = vld [vmem:[%s1194 + $0x18] sm:$0xf]
        %v1202 = vld [vmem:[%s1194 + $0x1c] sm:$0xf]
        %v1203 = vld [vmem:[%s1194 + $0x20] sm:$0xf]
        %v1204 = vld [vmem:[%s1194 + $0x24] sm:$0xf]
        %v1205 = vld [vmem:[%s1194 + $0x28] sm:$0xf]
        %v1206 = vld [vmem:[%s1194 + $0x2c] sm:$0xf]
        %v1207 = vld [vmem:[%s1194 + $0x30] sm:$0xf]
        %v1208 = vld [vmem:[%s1194 + $0x34] sm:$0xf]
        %v1209 = vld [vmem:[%s1194 + $0x38] sm:$0xf]
        %v1210 = vld [vmem:[%s1194 + $0x3c] sm:$0xf]
        %v1219 = vunpack.c.l.b16 %v1186
        %v1220 = vunpack.c.l.b16 %v1187
        %v1221 = vunpack.c.l.b16 %v1188
        %v1222 = vunpack.c.l.b16 %v1189
        %v1223 = vunpack.c.l.b16 %v1190
        %v1224 = vunpack.c.l.b16 %v1191
        %v1225 = vunpack.c.l.b16 %v1192
        %v1226 = vunpack.c.l.b16 %v1193
        %v1227 = vpack.c.b16 %v1220, %v1219
        %v1228 = vpack.c.b16 %v1222, %v1221
        %v1229 = vpack.c.b16 %v1224, %v1223
        %v1230 = vpack.c.b16 %v1226, %v1225
        %v1251 = vunpack.c.l.b16 %v1195
        %v1252 = vunpack.c.l.b16 %v1196
        %v1253 = vunpack.c.l.b16 %v1197
        %v1254 = vunpack.c.l.b16 %v1198
        %v1255 = vunpack.c.l.b16 %v1199
        %v1256 = vunpack.c.l.b16 %v1200
        %v1257 = vunpack.c.l.b16 %v1201
        %v1258 = vunpack.c.l.b16 %v1202
        %v1259 = vunpack.c.l.b16 %v1203
        %v1260 = vunpack.c.l.b16 %v1204
        %v1261 = vunpack.c.l.b16 %v1205
        %v1262 = vunpack.c.l.b16 %v1206
        %v1263 = vunpack.c.l.b16 %v1207
        %v1264 = vunpack.c.l.b16 %v1208
        %v1265 = vunpack.c.l.b16 %v1209
        %v1266 = vunpack.c.l.b16 %v1210
        %v1267 = vpack.c.b16 %v1252, %v1251
        %v1268 = vpack.c.b16 %v1254, %v1253
        %v1269 = vpack.c.b16 %v1256, %v1255
        %v1270 = vpack.c.b16 %v1258, %v1257
        %v1271 = vpack.c.b16 %v1260, %v1259
        %v1272 = vpack.c.b16 %v1262, %v1261
        %v1273 = vpack.c.b16 %v1264, %v1263
        %v1274 = vpack.c.b16 %v1266, %v1265
        %1283 = vmatpush.bf16.msra.mxu0 %v1274
        %1284 = vmatpush.bf16.msra.mxu0 %v1273
        %1285 = vmatpush.bf16.msra.mxu0 %v1272
        %1286 = vmatpush.bf16.msra.mxu0 %v1271
        %1287 = vmatpush.bf16.msra.mxu0 %v1270
        %1288 = vmatpush.bf16.msra.mxu0 %v1269
        %1289 = vmatpush.bf16.msra.mxu0 %v1268
        %1290 = vmatpush.bf16.msra.mxu0 %v1267
        %1291 = vmatmul.bf16.gmra.mxu0 %v1227
        %v1292 = vpop.f32.mrf.mxu0
        %v1293 = vadd.f32 0.0, %v1292
        %v1294 = vpop.f32.mrf.mxu0
        %v1295 = vadd.f32 0.0, %v1294
        %1296 = vmatmul.bf16.gmra.mxu0 %v1228
        %v1297 = vpop.f32.mrf.mxu0
        %v1298 = vadd.f32 0.0, %v1297
        %v1299 = vpop.f32.mrf.mxu0
        %v1300 = vadd.f32 0.0, %v1299
        %1301 = vmatmul.bf16.gmra.mxu0 %v1229
        %v1302 = vpop.f32.mrf.mxu0
        %v1303 = vadd.f32 0.0, %v1302
        %v1304 = vpop.f32.mrf.mxu0
        %v1305 = vadd.f32 0.0, %v1304
        %1306 = vmatmul.bf16.gmra.mxu0 %v1230
        %v1307 = vpop.f32.mrf.mxu0
        %v1308 = vadd.f32 0.0, %v1307
        %v1309 = vpop.f32.mrf.mxu0
        %v1310 = vadd.f32 0.0, %v1309
        %1311 = vdwg.mxu0
        %v1312 = vadd.f32 %v1177, %v1293
        %v1313 = vadd.f32 %v1178, %v1295
        %v1314 = vadd.f32 %v1179, %v1298
        %v1315 = vadd.f32 %v1180, %v1300
        %v1316 = vadd.f32 %v1181, %v1303
        %v1317 = vadd.f32 %v1182, %v1305
        %v1318 = vadd.f32 %v1183, %v1308
        %v1319 = vadd.f32 %v1184, %v1310
        %s1320 = scalar_lea.vmem %s167, 80
        %v1321 = vld [vmem:[%s1320] sm:$0xf]
        %v1322 = vld [vmem:[%s1320 + $0x8] sm:$0xf]
        %v1323 = vld [vmem:[%s1320 + $0x10] sm:$0xf]
        %v1324 = vld [vmem:[%s1320 + $0x18] sm:$0xf]
        %v1325 = vld [vmem:[%s1320 + $0x20] sm:$0xf]
        %v1326 = vld [vmem:[%s1320 + $0x28] sm:$0xf]
        %v1327 = vld [vmem:[%s1320 + $0x30] sm:$0xf]
        %v1328 = vld [vmem:[%s1320 + $0x38] sm:$0xf]
        %s1329 = scalar_lea.vmem %s1, 448
        %v1330 = vld [vmem:[%s1329] sm:$0xf]
        %v1331 = vld [vmem:[%s1329 + $0x4] sm:$0xf]
        %v1332 = vld [vmem:[%s1329 + $0x8] sm:$0xf]
        %v1333 = vld [vmem:[%s1329 + $0xc] sm:$0xf]
        %v1334 = vld [vmem:[%s1329 + $0x10] sm:$0xf]
        %v1335 = vld [vmem:[%s1329 + $0x14] sm:$0xf]
        %v1336 = vld [vmem:[%s1329 + $0x18] sm:$0xf]
        %v1337 = vld [vmem:[%s1329 + $0x1c] sm:$0xf]
        %v1338 = vld [vmem:[%s1329 + $0x20] sm:$0xf]
        %v1339 = vld [vmem:[%s1329 + $0x24] sm:$0xf]
        %v1340 = vld [vmem:[%s1329 + $0x28] sm:$0xf]
        %v1341 = vld [vmem:[%s1329 + $0x2c] sm:$0xf]
        %v1342 = vld [vmem:[%s1329 + $0x30] sm:$0xf]
        %v1343 = vld [vmem:[%s1329 + $0x34] sm:$0xf]
        %v1344 = vld [vmem:[%s1329 + $0x38] sm:$0xf]
        %v1345 = vld [vmem:[%s1329 + $0x3c] sm:$0xf]
        %v1354 = vunpack.c.l.b16 %v1321
        %v1355 = vunpack.c.l.b16 %v1322
        %v1356 = vunpack.c.l.b16 %v1323
        %v1357 = vunpack.c.l.b16 %v1324
        %v1358 = vunpack.c.l.b16 %v1325
        %v1359 = vunpack.c.l.b16 %v1326
        %v1360 = vunpack.c.l.b16 %v1327
        %v1361 = vunpack.c.l.b16 %v1328
        %v1362 = vpack.c.b16 %v1355, %v1354
        %v1363 = vpack.c.b16 %v1357, %v1356
        %v1364 = vpack.c.b16 %v1359, %v1358
        %v1365 = vpack.c.b16 %v1361, %v1360
        %v1386 = vunpack.c.l.b16 %v1330
        %v1387 = vunpack.c.l.b16 %v1331
        %v1388 = vunpack.c.l.b16 %v1332
        %v1389 = vunpack.c.l.b16 %v1333
        %v1390 = vunpack.c.l.b16 %v1334
        %v1391 = vunpack.c.l.b16 %v1335
        %v1392 = vunpack.c.l.b16 %v1336
        %v1393 = vunpack.c.l.b16 %v1337
        %v1394 = vunpack.c.l.b16 %v1338
        %v1395 = vunpack.c.l.b16 %v1339
        %v1396 = vunpack.c.l.b16 %v1340
        %v1397 = vunpack.c.l.b16 %v1341
        %v1398 = vunpack.c.l.b16 %v1342
        %v1399 = vunpack.c.l.b16 %v1343
        %v1400 = vunpack.c.l.b16 %v1344
        %v1401 = vunpack.c.l.b16 %v1345
        %v1402 = vpack.c.b16 %v1387, %v1386
        %v1403 = vpack.c.b16 %v1389, %v1388
        %v1404 = vpack.c.b16 %v1391, %v1390
        %v1405 = vpack.c.b16 %v1393, %v1392
        %v1406 = vpack.c.b16 %v1395, %v1394
        %v1407 = vpack.c.b16 %v1397, %v1396
        %v1408 = vpack.c.b16 %v1399, %v1398
        %v1409 = vpack.c.b16 %v1401, %v1400
        %1418 = vmatpush.bf16.msra.mxu0 %v1409
        %1419 = vmatpush.bf16.msra.mxu0 %v1408
        %1420 = vmatpush.bf16.msra.mxu0 %v1407
        %1421 = vmatpush.bf16.msra.mxu0 %v1406
        %1422 = vmatpush.bf16.msra.mxu0 %v1405
        %1423 = vmatpush.bf16.msra.mxu0 %v1404
        %1424 = vmatpush.bf16.msra.mxu0 %v1403
        %1425 = vmatpush.bf16.msra.mxu0 %v1402
        %1426 = vmatmul.bf16.gmra.mxu0 %v1362
        %v1427 = vpop.f32.mrf.mxu0
        %v1428 = vadd.f32 0.0, %v1427
        %v1429 = vpop.f32.mrf.mxu0
        %v1430 = vadd.f32 0.0, %v1429
        %1431 = vmatmul.bf16.gmra.mxu0 %v1363
        %v1432 = vpop.f32.mrf.mxu0
        %v1433 = vadd.f32 0.0, %v1432
        %v1434 = vpop.f32.mrf.mxu0
        %v1435 = vadd.f32 0.0, %v1434
        %1436 = vmatmul.bf16.gmra.mxu0 %v1364
        %v1437 = vpop.f32.mrf.mxu0
        %v1438 = vadd.f32 0.0, %v1437
        %v1439 = vpop.f32.mrf.mxu0
        %v1440 = vadd.f32 0.0, %v1439
        %1441 = vmatmul.bf16.gmra.mxu0 %v1365
        %v1442 = vpop.f32.mrf.mxu0
        %v1443 = vadd.f32 0.0, %v1442
        %v1444 = vpop.f32.mrf.mxu0
        %v1445 = vadd.f32 0.0, %v1444
        %1446 = vdwg.mxu0
        %v1447 = vadd.f32 %v1312, %v1428
        %v1448 = vadd.f32 %v1313, %v1430
        %v1449 = vadd.f32 %v1314, %v1433
        %v1450 = vadd.f32 %v1315, %v1435
        %v1451 = vadd.f32 %v1316, %v1438
        %v1452 = vadd.f32 %v1317, %v1440
        %v1453 = vadd.f32 %v1318, %v1443
        %v1454 = vadd.f32 %v1319, %v1445
        %v1455 = vld [vmem:[%s1185] sm:$0xf]
        %v1456 = vld [vmem:[%s1185 + $0x4] sm:$0x1]
        %v1457 = vld [vmem:[%s1185 + $0x8] sm:$0xf]
        %v1458 = vld [vmem:[%s1185 + $0xc] sm:$0x1]
        %v1459 = vld [vmem:[%s1185 + $0x10] sm:$0xf]
        %v1460 = vld [vmem:[%s1185 + $0x14] sm:$0x1]
        %v1461 = vld [vmem:[%s1185 + $0x18] sm:$0xf]
        %v1462 = vld [vmem:[%s1185 + $0x1c] sm:$0x1]
        %v1463 = vld [vmem:[%s1185 + $0x20] sm:$0xf]
        %v1464 = vld [vmem:[%s1185 + $0x24] sm:$0x1]
        %v1465 = vld [vmem:[%s1185 + $0x28] sm:$0xf]
        %v1466 = vld [vmem:[%s1185 + $0x2c] sm:$0x1]
        %v1467 = vld [vmem:[%s1185 + $0x30] sm:$0xf]
        %v1468 = vld [vmem:[%s1185 + $0x34] sm:$0x1]
        %v1469 = vld [vmem:[%s1185 + $0x38] sm:$0xf]
        %v1470 = vld [vmem:[%s1185 + $0x3c] sm:$0x1]
        %v1472 = vshrl.u32 %v1455, 16
        %v1474 = vrot.slane %v1472, 4
        %v1475 = vshll.u32 %v1455, 16
        %v1477 = vrot.slane %v1475, 5
        %v1478 = vor.u32 %v1474, %v1477
        %v1479 = vrot.slane %v1478, 4
        %v1481 = vshll.u32 %v1456, 16
        %v1483 = vrot.slane %v1481, 5
        %v1484 = vsel %vm438, %v1479, %v1483
        %v1486 = vshrl.u32 %v1457, 16
        %v1488 = vrot.slane %v1486, 4
        %v1489 = vshll.u32 %v1457, 16
        %v1491 = vrot.slane %v1489, 5
        %v1492 = vor.u32 %v1488, %v1491
        %v1493 = vrot.slane %v1492, 4
        %v1495 = vshll.u32 %v1458, 16
        %v1497 = vrot.slane %v1495, 5
        %v1498 = vsel %vm438, %v1493, %v1497
        %v1500 = vshrl.u32 %v1459, 16
        %v1502 = vrot.slane %v1500, 4
        %v1503 = vshll.u32 %v1459, 16
        %v1505 = vrot.slane %v1503, 5
        %v1506 = vor.u32 %v1502, %v1505
        %v1507 = vrot.slane %v1506, 4
        %v1509 = vshll.u32 %v1460, 16
        %v1511 = vrot.slane %v1509, 5
        %v1512 = vsel %vm438, %v1507, %v1511
        %v1514 = vshrl.u32 %v1461, 16
        %v1516 = vrot.slane %v1514, 4
        %v1517 = vshll.u32 %v1461, 16
        %v1519 = vrot.slane %v1517, 5
        %v1520 = vor.u32 %v1516, %v1519
        %v1521 = vrot.slane %v1520, 4
        %v1523 = vshll.u32 %v1462, 16
        %v1525 = vrot.slane %v1523, 5
        %v1526 = vsel %vm438, %v1521, %v1525
        %v1528 = vshrl.u32 %v1463, 16
        %v1530 = vrot.slane %v1528, 4
        %v1531 = vshll.u32 %v1463, 16
        %v1533 = vrot.slane %v1531, 5
        %v1534 = vor.u32 %v1530, %v1533
        %v1535 = vrot.slane %v1534, 4
        %v1537 = vshll.u32 %v1464, 16
        %v1539 = vrot.slane %v1537, 5
        %v1540 = vsel %vm438, %v1535, %v1539
        %v1542 = vshrl.u32 %v1465, 16
        %v1544 = vrot.slane %v1542, 4
        %v1545 = vshll.u32 %v1465, 16
        %v1547 = vrot.slane %v1545, 5
        %v1548 = vor.u32 %v1544, %v1547
        %v1549 = vrot.slane %v1548, 4
        %v1551 = vshll.u32 %v1466, 16
        %v1553 = vrot.slane %v1551, 5
        %v1554 = vsel %vm438, %v1549, %v1553
        %v1556 = vshrl.u32 %v1467, 16
        %v1558 = vrot.slane %v1556, 4
        %v1559 = vshll.u32 %v1467, 16
        %v1561 = vrot.slane %v1559, 5
        %v1562 = vor.u32 %v1558, %v1561
        %v1563 = vrot.slane %v1562, 4
        %v1565 = vshll.u32 %v1468, 16
        %v1567 = vrot.slane %v1565, 5
        %v1568 = vsel %vm438, %v1563, %v1567
        %v1570 = vshrl.u32 %v1469, 16
        %v1572 = vrot.slane %v1570, 4
        %v1573 = vshll.u32 %v1469, 16
        %v1575 = vrot.slane %v1573, 5
        %v1576 = vor.u32 %v1572, %v1575
        %v1577 = vrot.slane %v1576, 4
        %v1579 = vshll.u32 %v1470, 16
        %v1581 = vrot.slane %v1579, 5
        %v1582 = vsel %vm438, %v1577, %v1581
        %s1583 = scalar_lea.vmem %s1, 512
        %v1584 = vld [vmem:[%s1583] sm:$0xf]
        %v1585 = vld [vmem:[%s1583 + $0x4] sm:$0xf]
        %v1586 = vld [vmem:[%s1583 + $0x8] sm:$0xf]
        %v1587 = vld [vmem:[%s1583 + $0xc] sm:$0xf]
        %v1588 = vld [vmem:[%s1583 + $0x10] sm:$0xf]
        %v1589 = vld [vmem:[%s1583 + $0x14] sm:$0xf]
        %v1590 = vld [vmem:[%s1583 + $0x18] sm:$0xf]
        %v1591 = vld [vmem:[%s1583 + $0x1c] sm:$0xf]
        %v1592 = vld [vmem:[%s1583 + $0x20] sm:$0xf]
        %v1593 = vld [vmem:[%s1583 + $0x24] sm:$0xf]
        %v1594 = vld [vmem:[%s1583 + $0x28] sm:$0xf]
        %v1595 = vld [vmem:[%s1583 + $0x2c] sm:$0xf]
        %v1596 = vld [vmem:[%s1583 + $0x30] sm:$0xf]
        %v1597 = vld [vmem:[%s1583 + $0x34] sm:$0xf]
        %v1598 = vld [vmem:[%s1583 + $0x38] sm:$0xf]
        %v1599 = vld [vmem:[%s1583 + $0x3c] sm:$0xf]
        %v1600 = vunpack.c.l.b16 %v1484
        %v1601 = vunpack.c.l.b16 %v1498
        %v1602 = vunpack.c.l.b16 %v1512
        %v1603 = vunpack.c.l.b16 %v1526
        %v1604 = vunpack.c.l.b16 %v1540
        %v1605 = vunpack.c.l.b16 %v1554
        %v1606 = vunpack.c.l.b16 %v1568
        %v1607 = vunpack.c.l.b16 %v1582
        %v1608 = vpack.c.b16 %v1601, %v1600
        %v1609 = vpack.c.b16 %v1603, %v1602
        %v1610 = vpack.c.b16 %v1605, %v1604
        %v1611 = vpack.c.b16 %v1607, %v1606
        %v1632 = vunpack.c.l.b16 %v1584
        %v1633 = vunpack.c.l.b16 %v1585
        %v1634 = vunpack.c.l.b16 %v1586
        %v1635 = vunpack.c.l.b16 %v1587
        %v1636 = vunpack.c.l.b16 %v1588
        %v1637 = vunpack.c.l.b16 %v1589
        %v1638 = vunpack.c.l.b16 %v1590
        %v1639 = vunpack.c.l.b16 %v1591
        %v1640 = vunpack.c.l.b16 %v1592
        %v1641 = vunpack.c.l.b16 %v1593
        %v1642 = vunpack.c.l.b16 %v1594
        %v1643 = vunpack.c.l.b16 %v1595
        %v1644 = vunpack.c.l.b16 %v1596
        %v1645 = vunpack.c.l.b16 %v1597
        %v1646 = vunpack.c.l.b16 %v1598
        %v1647 = vunpack.c.l.b16 %v1599
        %v1648 = vpack.c.b16 %v1633, %v1632
        %v1649 = vpack.c.b16 %v1635, %v1634
        %v1650 = vpack.c.b16 %v1637, %v1636
        %v1651 = vpack.c.b16 %v1639, %v1638
        %v1652 = vpack.c.b16 %v1641, %v1640
        %v1653 = vpack.c.b16 %v1643, %v1642
        %v1654 = vpack.c.b16 %v1645, %v1644
        %v1655 = vpack.c.b16 %v1647, %v1646
        %1664 = vmatpush.bf16.msra.mxu0 %v1655
        %1665 = vmatpush.bf16.msra.mxu0 %v1654
        %1666 = vmatpush.bf16.msra.mxu0 %v1653
        %1667 = vmatpush.bf16.msra.mxu0 %v1652
        %1668 = vmatpush.bf16.msra.mxu0 %v1651
        %1669 = vmatpush.bf16.msra.mxu0 %v1650
        %1670 = vmatpush.bf16.msra.mxu0 %v1649
        %1671 = vmatpush.bf16.msra.mxu0 %v1648
        %1672 = vmatmul.bf16.gmra.mxu0 %v1608
        %v1673 = vpop.f32.mrf.mxu0
        %v1674 = vadd.f32 0.0, %v1673
        %v1675 = vpop.f32.mrf.mxu0
        %v1676 = vadd.f32 0.0, %v1675
        %1677 = vmatmul.bf16.gmra.mxu0 %v1609
        %v1678 = vpop.f32.mrf.mxu0
        %v1679 = vadd.f32 0.0, %v1678
        %v1680 = vpop.f32.mrf.mxu0
        %v1681 = vadd.f32 0.0, %v1680
        %1682 = vmatmul.bf16.gmra.mxu0 %v1610
        %v1683 = vpop.f32.mrf.mxu0
        %v1684 = vadd.f32 0.0, %v1683
        %v1685 = vpop.f32.mrf.mxu0
        %v1686 = vadd.f32 0.0, %v1685
        %1687 = vmatmul.bf16.gmra.mxu0 %v1611
        %v1688 = vpop.f32.mrf.mxu0
        %v1689 = vadd.f32 0.0, %v1688
        %v1690 = vpop.f32.mrf.mxu0
        %v1691 = vadd.f32 0.0, %v1690
        %1692 = vdwg.mxu0
        %v1693 = vadd.f32 %v1447, %v1674
        %v1694 = vadd.f32 %v1448, %v1676
        %v1695 = vadd.f32 %v1449, %v1679
        %v1696 = vadd.f32 %v1450, %v1681
        %v1697 = vadd.f32 %v1451, %v1684
        %v1698 = vadd.f32 %v1452, %v1686
        %v1699 = vadd.f32 %v1453, %v1689
        %v1700 = vadd.f32 %v1454, %v1691
        %1701 = vst [vmem:[%s160] sm:$0xff] %v1693
        %1702 = vst [vmem:[%s160 + $0x8] sm:$0xff] %v1694
        %1703 = vst [vmem:[%s160 + $0x10] sm:$0xff] %v1695
        %1704 = vst [vmem:[%s160 + $0x18] sm:$0xff] %v1696
        %1705 = vst [vmem:[%s160 + $0x20] sm:$0xff] %v1697
        %1706 = vst [vmem:[%s160 + $0x28] sm:$0xff] %v1698
        %1707 = vst [vmem:[%s160 + $0x30] sm:$0xff] %v1699
        %1708 = vst [vmem:[%s160 + $0x38] sm:$0xff] %v1700
        %p1709 = scmp.eq.s32.totalorder %s19, 0
        // Predicated region
        $region29: #{tpu_custom_call.1} parent=27 // pred_check
          %p1710 = pneg %p1709
        $region30: #{tpu_custom_call.1} parent=27 // pred_check_branch
          %1712 = sbr.rel (%p1710) target = $region32
        $region31: #{tpu_custom_call.1} parent=27 // pred_region
          %1713 = vst [vmem:[#allocation4] sm:$0x3] 0.0
        $region32: #{tpu_custom_call.1} parent=27 // pred_fallthru
          _
        %v1714 = vadd.f32 %v1693, %v1694
        %v1715 = vadd.f32 %v1714, %v1695
        %v1716 = vadd.f32 %v1715, %v1696
        %v1717 = vadd.f32 %v1716, %v1697
        %v1718 = vadd.f32 %v1717, %v1698
        %v1719 = vadd.f32 %v1718, %v1699
        %v1720 = vadd.f32 %v1719, %v1700
        %v1721 = vrot.slane %v1720, 4
        %v1722 = vadd.f32 %v1720, %v1721
        %v1723 = vrot.slane %v1722, 2
        %v1724 = vadd.f32 %v1722, %v1723
        %v1725 = vrot.slane %v1724, 1
        %v1726 = vadd.f32 %v1724, %v1725
        %v1727 = vmul.f32 %v1693, %v1693
        %v1728 = vmul.f32 %v1694, %v1694
        %v1729 = vmul.f32 %v1695, %v1695
        %v1730 = vmul.f32 %v1696, %v1696
        %v1731 = vmul.f32 %v1697, %v1697
        %v1732 = vmul.f32 %v1698, %v1698
        %v1733 = vmul.f32 %v1699, %v1699
        %v1734 = vmul.f32 %v1700, %v1700
        %v1735 = vadd.f32 %v1727, %v1728
        %v1736 = vadd.f32 %v1735, %v1729
        %v1737 = vadd.f32 %v1736, %v1730
        %v1738 = vadd.f32 %v1737, %v1731
        %v1739 = vadd.f32 %v1738, %v1732
        %v1740 = vadd.f32 %v1739, %v1733
        %v1741 = vadd.f32 %v1740, %v1734
        %v1742 = vrot.slane %v1741, 4
        %v1743 = vadd.f32 %v1741, %v1742
        %v1744 = vrot.slane %v1743, 2
        %v1745 = vadd.f32 %v1743, %v1744
        %v1746 = vrot.slane %v1745, 1
        %v1747 = vadd.f32 %v1745, %v1746
        %v1748 = vld [vmem:[#allocation4] sm:$0x3]
        %vm1749 = vcmask 1040384
        %v1750 = vsel %vm1749, %v1726, %v1747
        %v1751 = vadd.f32 %v1748, %v1750
        %1752 = vst [vmem:[#allocation4] sm:$0x3] %v1751
        %s1753 = sand.u32 %s74, 1
        %s1754 = scalar_lea.sflag [#allocation3], %s1753
        %s1755 = sand.u32 %s74, 1
        %s1756 = smul.addr %s1755, 64
        %s1757 = scalar_lea.vmem [#allocation2], %s1756
        // Predicated region
        $region33: #{tpu_custom_call.1} parent=27 // pred_check
          %p1758 = pneg %p84
        $region34: #{tpu_custom_call.1} parent=27 // pred_check_branch
          %1760 = sbr.rel (%p1758) target = $region36
        $region35: #{tpu_custom_call.1} parent=27 // pred_region
          %1762 = vsyncadd %s1754, 0
          %s1763 = smul.addr %s19, 8
          %s1764 = smul.addr %s1763, 8
          %s1765 = scalar_lea.hbm %s2, %s1764
          %s1766 = sshll.u32 %s1757, 4
          %s1767 = int_to_ptr.vmem [resolvable:$true] %s1766
          %s1768 = sshll.u32 %s1765, 4
          %s1769 = int_to_ptr.hbm [resolvable:$true] %s1768
          %1774 = dma.vmem_to_hbm [thread:$0]  %s1767, 1024, %s1769, %s1754, 128, 128, 8
        $region36: #{tpu_custom_call.1} parent=27 // pred_fallthru
          _
        // Predicated region
        $region37: #{tpu_custom_call.1} parent=27 // pred_check
          %p1775 = pneg %p105
        $region38: #{tpu_custom_call.1} parent=27 // pred_check_branch
          %1777 = sbr.rel (%p1775) target = $region40
        $region39: #{tpu_custom_call.1} parent=27 // pred_region
          %1779 = vsyncadd [#allocation5], 0
          %s1781 = sshll.u32 [#allocation4], 4
          %s1782 = int_to_ptr.vmem [resolvable:$true] %s1781
          %s1783 = sshll.u32 %s3, 4
          %s1784 = int_to_ptr.hbm [resolvable:$true] %s1783
          %1786 = dma.vmem_to_hbm [thread:$0]  %s1782, 32, %s1784, [#allocation5]
        $region40: #{tpu_custom_call.1} parent=27 // pred_fallthru
          _
        // Predicated region
        $region41: #{tpu_custom_call.1} parent=27 // pred_check
          %p1787 = pneg %p105
        $region42: #{tpu_custom_call.1} parent=27 // pred_check_branch
          %1789 = sbr.rel (%p1787) target = $region44
        $region43: #{tpu_custom_call.1} parent=27 // pred_region
          %1791 = dma.done [#allocation5], 32
        $region44: #{tpu_custom_call.1} parent=27 // pred_fallthru
          _
      $region28: #{tpu_custom_call.1} parent=5 // pred_fallthru
        _
      %p1792 = scmp.le.s32.totalorder 2, %s14
      // Predicated region
      $region45: #{tpu_custom_call.1} parent=5 // pred_check
        %p1793 = pneg %p1792
      $region46: #{tpu_custom_call.1} parent=5 // pred_check_branch
        %1795 = sbr.rel (%p1793) target = $region48
      $region47: #{tpu_custom_call.1} parent=5 // pred_region
        %s1796 = ssub.s32 %s14, 2
        // Predicated region
        $region49: #{tpu_custom_call.1} parent=47 // pred_check
          %p1797 = pneg %p90
        $region50: #{tpu_custom_call.1} parent=47 // pred_check_branch
          %1799 = sbr.rel (%p1797) target = $region52
        $region51: #{tpu_custom_call.1} parent=47 // pred_region
          %s1800 = sand.u32 %s75, 1
          %s1801 = scalar_lea.sflag [#allocation3], %s1800
          %s1802 = sand.u32 %s75, 1
          %s1803 = smul.addr %s1802, 64
          %s1804 = scalar_lea.vmem [#allocation2], %s1803
          %1806 = dma.done %s1801, 1024
        $region52: #{tpu_custom_call.1} parent=47 // pred_fallthru
          _
      $region48: #{tpu_custom_call.1} parent=5 // pred_fallthru
        _
    $region6: #{tpu_custom_call.1} parent=1 // loop_footer
      %s18 = sadd.s32 1, %s14
    $region7: #{tpu_custom_call.1} parent=1 // loop_footer_branch
      %13 = sbr.rel target = $region3
    $region8: #{tpu_custom_call.1} parent=1 // loop_exit
      _
    %1807 = vsyncpa [#allocation3], 1
    %s1808 = scalar_lea.sflag [#allocation3], 1
    %1809 = vsyncpa %s1808, 1
    %1810 = vsyncpa [#allocation5], 1

</llo_original>
